<compile_context>
chip_gen: v5e
topology: v5e:2x2
jax: 0.10.0
libtpu: 0.0.40
codegen_flags: <defaults>
</compile_context>

<pallas_src>
import functools

import numpy as np

import jax
import jax.numpy as jnp
from jax.experimental import pallas as pl
from jax.experimental.pallas import tpu as pltpu


# ------------------------------ model dimensions ------------------------------ #
B, CIN, H, W = 2, 3, 16, 16          # input batch / channels / spatial (NCHW like PyTorch)
C1, C2 = 16, 32                      # conv channel widths
FEATURE_DIM = 32
CLASS_NUM = 10

HO1 = (H + 2 - 3) // 2 + 1           # 8   (3x3, stride 2, pad 1)
WO1 = (W + 2 - 3) // 2 + 1           # 8
HO2 = (HO1 + 2 - 3) // 2 + 1         # 4
WO2 = (WO1 + 2 - 3) // 2 + 1         # 4
N_SPATIAL2 = HO2 * WO2               # 16
N_TAPS = 9                           # 3x3 kernel taps

LANES = 128                          # lane-dense padded width of every matmul output
K1P = 32                             # conv1 im2col K (3*3*CIN = 27) padded to a sublane multiple
BP = 16                              # classifier batch rows padded to one bf16 sublane tile

VMEM_SPEC = pl.BlockSpec(memory_space=pltpu.MemorySpace.VMEM)
SMEM_SPEC = pl.BlockSpec(memory_space=pltpu.MemorySpace.SMEM)


# ------------------------------ fused Pallas kernel ---------------------------- #

def _fused_forward_kernel(p1_ref, w1_ref, b1_ref, a1_ref, s_ref, w2_ref, b2_ref,
                          a2_ref, e_ref, wfc_ref, bc_ref, tgt_ref, out_ref,
                          *, batch, class_num, n_taps, n_spatial, bp):
    """Whole forward pass in one kernel; all activations stay in VMEM / vregs.

    p1_ref   : (B*HO1*WO1, K1P)          bf16  conv1 im2col patches (rows b-major)
    w1_ref   : (K1P, 128)                bf16  conv1 weight, zero-padded
    b1/a1    : (1, 128)                  f32   conv1 bias / PReLU slope, zero-padded
    s_ref    : (9*B*HO2*WO2, B*HO1*WO1)  bf16  0/1 conv2 im2col row-selection matrix
    w2_ref   : (9, 128, 128)             bf16  conv2 per-tap weights, zero-padded
    b2/a2    : (1, 128)                  f32   conv2 bias / PReLU slope, zero-padded
    e_ref    : (16*BP, B*HO2*WO2)        f32   0/1 batch-expand matrix (rows s*BP+b)
    wfc_ref  : (16, 128, 128)            bf16  per-spatial-position (wf @ wc), zero-padded
    bc_ref   : (1, 128)                  f32   bf @ wc, zero-padded
    tgt_ref  : (B,)                      int32 class labels (SMEM)
    out_ref  : (BP, 128)                 f32   rows < B: logits; rows >= B: loss (broadcast)
    """
    f32, bf16 = jnp.float32, jnp.bfloat16
    n_rows2 = n_spatial * batch                                       # B*HO2*WO2

    # ---- conv1: matmul + bias + PReLU (output channels padded to 128 lanes) ----
    y1 = jnp.dot(p1_ref[...], w1_ref[...], preferred_element_type=f32)
    y1 = y1 + b1_ref[...]
    y1 = jnp.where(y1 > 0.0, y1, a1_ref[...] * y1)                    # (B*HO1*WO1, 128) f32
    y1b = y1.astype(bf16)                                             # hoisted cast (1 of 3)

    # ---- conv2: im2col selection matmul, then ONE batched dot over taps + sum ----
    g = jnp.dot(s_ref[...], y1b, preferred_element_type=f32)          # (9*n_rows2, 128)
    gb = g.astype(bf16).reshape(n_taps, n_rows2, LANES)               # hoisted cast; 32-row groups
    conv2 = jnp.einsum('tmk,tkn->tmn', gb, w2_ref[...],
                       preferred_element_type=f32)                    # (9, n_rows2, 128)
    y2 = jnp.sum(conv2, axis=0) + b2_ref[...]
    y2 = jnp.where(y2 > 0.0, y2, a2_ref[...] * y2)                    # (n_rows2, 128) f32

    # ---- expand 2 batch rows per spatial pos into a 16-row tile-aligned frame ----
    # (0/1 matmul is exact in f32; padded rows are exactly zero.)
    y2p = jnp.dot(e_ref[...], y2, preferred_element_type=f32)         # (n_spatial*bp, 128)
    y2pb = y2p.astype(bf16).reshape(n_spatial, bp, LANES)             # hoisted cast; 16-row groups

    # ---- classifier (FC folded in): ONE batched dot over spatial positions + sum ----
    cls = jnp.einsum('sbk,skn->sbn', y2pb, wfc_ref[...],
                     preferred_element_type=f32)                      # (n_spatial, bp, 128)
    logits = jnp.sum(cls, axis=0) + bc_ref[...]                       # (bp, 128); rows < batch real

    # ---- cross-entropy (padded class lanes / padded batch rows masked) ----
    rows = jax.lax.broadcasted_iota(jnp.int32, (bp, LANES), 0)
    cols = jax.lax.broadcasted_iota(jnp.int32, (bp, LANES), 1)
    lm = jnp.where(cols < class_num, logits, jnp.full_like(logits, -1e30))
    m = jnp.max(lm, axis=-1, keepdims=True)
    lse = jnp.log(jnp.sum(jnp.exp(lm - m), axis=-1, keepdims=True))
    onehot = jnp.zeros((bp, LANES), f32)
    for b in range(batch):                                            # batch=2, static unroll
        onehot = onehot + ((rows == b) & (cols == tgt_ref[b])).astype(f32)
    tgt_logit = jnp.sum(onehot * lm, axis=-1, keepdims=True)
    nll = (m + lse) - tgt_logit                                       # (bp, 1)
    rmask = jax.lax.broadcasted_iota(jnp.int32, (bp, 1), 0) < batch
    loss = jnp.sum(jnp.where(rmask, nll, 0.0)) * (1.0 / batch)

    # ---- single lane-dense output slab: one unmasked full-tile store ----
    out_ref[...] = jnp.where(rows < batch, logits, loss)


# --------------------------- parameter / layout prep --------------------------- #

def _build_conv2_selection():
    """0/1 matrix turning conv2's im2col row gather into a matmul.

    Input rows  (y1):       r_in  = b*(HO1*WO1) + ih*WO1 + iw     (b-major, matches p1)
    Output rows (per tap):  r_out = (oh*WO2 + ow)*B + b           (spatial-major, batch fastest)
    Taps stack along rows: block t covers rows [t*B*HO2*WO2, (t+1)*B*HO2*WO2).
    Out-of-bounds taps (the conv's zero padding) are all-zero rows.
    """
    n_in = B * HO1 * WO1
    n_out = B * HO2 * WO2
    sel = np.zeros((N_TAPS, n_out, n_in), np.float32)
    for ki in range(3):
        for kj in range(3):
            t = ki * 3 + kj
            for b in range(B):
                for oh in range(HO2):
                    for ow in range(WO2):
                        ih = 2 * oh + ki - 1
                        iw = 2 * ow + kj - 1
                        if 0 <= ih < HO1 and 0 <= iw < WO1:
                            r_out = (oh * WO2 + ow) * B + b
                            r_in = b * (HO1 * WO1) + ih * WO1 + iw
                            sel[t, r_out, r_in] = 1.0
    return sel.reshape(N_TAPS * n_out, n_in)


def _build_batch_expand():
    """0/1 matrix mapping y2 row s*B+b -> padded row s*BP+b (rows b>=B stay exactly zero)."""
    n_rows2 = N_SPATIAL2 * B
    e = np.zeros((N_SPATIAL2 * BP, n_rows2), np.float32)
    for s in range(N_SPATIAL2):
        for b in range(B):
            e[s * BP + b, s * B + b] = 1.0
    return e


def prepare_params(raw):
    """One-time (outside jit) layout prep:
      * zero-pad all matmul operands to lane-dense 128-wide slabs,
      * fold the (linear, bias-only) FC layer into the classifier,
      * cast MXU operands to bf16 (accumulation stays f32 in-kernel),
      * build the conv2 im2col selection matrix and the classifier batch-expand matrix.
    """
    bf16 = jnp.bfloat16

    def pad_mat(a, rows, cols):
        return jnp.zeros((rows, cols), jnp.float32).at[:a.shape[0], :a.shape[1]].set(a)

    def pad_vec(v, cols):
        return jnp.zeros((1, cols), jnp.float32).at[0, :v.shape[0]].set(v)

    w2p = jnp.zeros((N_TAPS, LANES, LANES), jnp.float32)
    for t in range(N_TAPS):
        w2p = w2p.at[t, :C1, :C2].set(raw["w2"][t * C1:(t + 1) * C1, :])

    wfc = raw["wf"] @ raw["wc"]                     # (HO2*WO2*C2, CLASS_NUM), exact algebra
    bc = raw["bf"] @ raw["wc"]                      # (CLASS_NUM,)
    wfcp = jnp.zeros((N_SPATIAL2, LANES, LANES), jnp.float32)
    for s in range(N_SPATIAL2):
        wfcp = wfcp.at[s, :C2, :CLASS_NUM].set(wfc[s * C2:(s + 1) * C2, :])

    return {
        "w1p": pad_mat(raw["w1"], K1P, LANES).astype(bf16),
        "b1p": pad_vec(raw["b1"], LANES),
        "a1p": pad_vec(raw["a1"], LANES),
        "s_cat": jnp.asarray(_build_conv2_selection(), bf16),
        "w2p": w2p.astype(bf16),
        "b2p": pad_vec(raw["b2"], LANES),
        "a2p": pad_vec(raw["a2"], LANES),
        "ep": jnp.asarray(_build_batch_expand(), jnp.float32),
        "wfcp": wfcp.astype(bf16),
        "bcp": pad_vec(bc, LANES),
    }


# --------------------------------- glue (JAX) ---------------------------------- #

def im2col(x_nhwc, kh, kw, stride, pad):
    """x: (B, H, W, C) -> patches (B*Ho*Wo, kh*kw*C), Ho, Wo  (rows b-major, K tap-major)."""
    b, h, w, c = x_nhwc.shape
    xp = jnp.pad(x_nhwc, ((0, 0), (pad, pad), (pad, pad), (0, 0)))
    ho = (h + 2 * pad - kh) // stride + 1
    wo = (w + 2 * pad - kw) // stride + 1
    cols = []
    for i in range(kh):
        for j in range(kw):
            cols.append(xp[:, i:i + stride * ho:stride, j:j + stride * wo:stride, :])
    patches = jnp.stack(cols, axis=3)                 # (B, Ho, Wo, kh*kw, C)
    return patches.reshape(b * ho * wo, kh * kw * c), ho, wo


def create_model_forward(x_nchw, target, pp):
    """Pallas equivalent of CreateModel.forward(input, target) -> (score, loss_ce)."""
    x = jnp.transpose(x_nchw, (0, 2, 3, 1))                           # NCHW -> NHWC
    p1, _, _ = im2col(x, 3, 3, 2, 1)                                  # (B*HO1*WO1, 27)
    p1p = jnp.pad(p1, ((0, 0), (0, K1P - p1.shape[1]))).astype(jnp.bfloat16)
    tgt = target.astype(jnp.int32).reshape(B)                         # SMEM scalars

    # Single grid-less fused kernel: ~1 MiB of weights + activations, so everything lives
    # in VMEM with large headroom on v5e / v6e / v7x.
    # NOTE: if this forward is run repeatedly or the batch is scaled up, add a batch grid
    # with dimension_semantics=("parallel",) (v7x: feeds both TensorCores) and constant
    # index_maps on the weight operands so they stay VMEM-resident across iterations.
    out = pl.pallas_call(
        functools.partial(_fused_forward_kernel, batch=B, class_num=CLASS_NUM,
                          n_taps=N_TAPS, n_spatial=N_SPATIAL2, bp=BP),
        out_shape=jax.ShapeDtypeStruct((BP, LANES), jnp.float32),
        in_specs=[VMEM_SPEC] * 11 + [SMEM_SPEC],
        out_specs=VMEM_SPEC,
    )(p1p, pp["w1p"], pp["b1p"], pp["a1p"], pp["s_cat"], pp["w2p"], pp["b2p"],
      pp["a2p"], pp["ep"], pp["wfcp"], pp["bcp"], tgt)

    score = out[:B, :CLASS_NUM]
    loss = out[B, 0]
    return score, loss


# ------------------------------ pure-JAX reference ------------------------------ #

def reference_forward(x_nchw, target, params):
    b = x_nchw.shape[0]
    x = jnp.transpose(x_nchw, (0, 2, 3, 1))
    p1, ho1, wo1 = im2col(x, 3, 3, 2, 1)
    y1 = p1 @ params["w1"] + params["b1"]
    y1 = jnp.where(y1 > 0, y1, params["a1"] * y1).reshape(b, ho1, wo1, -1)
    p2, ho2, wo2 = im2col(y1, 3, 3, 2, 1)
    y2 = p2 @ params["w2"] + params["b2"]
    y2 = jnp.where(y2 > 0, y2, params["a2"] * y2).reshape(b, ho2, wo2, -1)
    feat = y2.reshape(b, -1) @ params["wf"] + params["bf"]
    logits = feat @ params["wc"]
    logp = jax.nn.log_softmax(logits, axis=-1)
    onehot = jax.nn.one_hot(target, logits.shape[1], dtype=jnp.float32)
    loss = -jnp.mean(jnp.sum(onehot * logp, axis=-1))
    return logits, loss


# ------------------------------------ main -------------------------------------- #

if __name__ == "__main__":
    key = jax.random.PRNGKey(0)
    ks = jax.random.split(key, 8)

    params = {
        "w1": 0.1 * jax.random.normal(ks[0], (3 * 3 * CIN, C1), jnp.float32),
        "b1": 0.01 * jax.random.normal(ks[1], (C1,), jnp.float32),
        "a1": jnp.full((C1,), 0.25, jnp.float32),                 # PReLU slope
        "w2": 0.1 * jax.random.normal(ks[2], (3 * 3 * C1, C2), jnp.float32),
        "b2": 0.01 * jax.random.normal(ks[3], (C2,), jnp.float32),
        "a2": jnp.full((C2,), 0.25, jnp.float32),
        "wf": 0.05 * jax.random.normal(ks[4], (HO2 * WO2 * C2, FEATURE_DIM), jnp.float32),
        "bf": 0.01 * jax.random.normal(ks[5], (FEATURE_DIM,), jnp.float32),
        "wc": 0.1 * jax.random.normal(ks[6], (FEATURE_DIM, CLASS_NUM), jnp.float32),
    }

    x = jax.random.normal(ks[7], (B, CIN, H, W), jnp.float32)      # NCHW, like PyTorch
    target = jnp.array([1, 7], dtype=jnp.int32)

    pp = prepare_params(params)                                    # one-time padding / folding

    fwd = jax.jit(create_model_forward)
    score, loss = fwd(x, target, pp)
    score = jax.block_until_ready(score)
    loss = jax.block_until_ready(loss)

    score_ref, loss_ref = reference_forward(x, target, params)
    # bf16 MXU operands (f32 accumulation) -> compare against the f32 reference with a
    # bf16-appropriate tolerance; real layout/selection bugs would be O(0.1) or larger.
    assert score.shape == (B, CLASS_NUM)
    assert jnp.allclose(score, score_ref, atol=2e-2, rtol=2e-2)
    assert jnp.allclose(loss, loss_ref, atol=2e-2, rtol=2e-2)

    print("KERNEL_OK")
</pallas_src>

<mosaic_0001>
module attributes {stable_mosaic.version = 11 : i64} {
  func.func @_fused_forward_kernel(%arg0: memref<128x32xbf16, #tpu.memory_space<vmem>>, %arg1: memref<32x128xbf16, #tpu.memory_space<vmem>>, %arg2: memref<1x128xf32, #tpu.memory_space<vmem>>, %arg3: memref<1x128xf32, #tpu.memory_space<vmem>>, %arg4: memref<288x128xbf16, #tpu.memory_space<vmem>>, %arg5: memref<9x128x128xbf16, #tpu.memory_space<vmem>>, %arg6: memref<1x128xf32, #tpu.memory_space<vmem>>, %arg7: memref<1x128xf32, #tpu.memory_space<vmem>>, %arg8: memref<256x32xf32, #tpu.memory_space<vmem>>, %arg9: memref<16x128x128xbf16, #tpu.memory_space<vmem>>, %arg10: memref<1x128xf32, #tpu.memory_space<vmem>>, %arg11: memref<2xi32, #tpu.memory_space<smem>>, %arg12: memref<16x128xf32, #tpu.memory_space<vmem>>) attributes {dimension_semantics = [], scalar_prefetch = 0 : i64, scratch_operands = 0 : i64, tpu.core_type = #tpu.core_type<tc>} {
    %c0 = arith.constant 0 : index
    %c0_0 = arith.constant 0 : index
    %0 = vector.load %arg0[%c0, %c0_0] : memref<128x32xbf16, #tpu.memory_space<vmem>>, vector<128x32xbf16>
    %c0_1 = arith.constant 0 : index
    %c0_2 = arith.constant 0 : index
    %1 = vector.load %arg1[%c0_1, %c0_2] : memref<32x128xbf16, #tpu.memory_space<vmem>>, vector<32x128xbf16>
    %cst = arith.constant dense<0.000000e+00> : vector<128x128xf32>
    %2 = tpu.matmul %0, %1, %cst {dimension_numbers = #tpu.dot_dimension_numbers<[1], [0], [0], [1], [0, 0, 1, 1], [], []>} : vector<128x32xbf16>, vector<32x128xbf16>, vector<128x128xf32> -> vector<128x128xf32>
    %c0_3 = arith.constant 0 : index
    %c0_4 = arith.constant 0 : index
    %3 = vector.load %arg2[%c0_3, %c0_4] : memref<1x128xf32, #tpu.memory_space<vmem>>, vector<1x128xf32>
    %4 = vector.broadcast %3 : vector<1x128xf32> to vector<128x128xf32>
    %5 = arith.addf %2, %4 : vector<128x128xf32>
    %cst_5 = arith.constant 0.000000e+00 : f32
    %6 = vector.broadcast %cst_5 : f32 to vector<128x128xf32>
    %7 = arith.cmpf ogt, %5, %6 : vector<128x128xf32>
    %c0_6 = arith.constant 0 : index
    %c0_7 = arith.constant 0 : index
    %8 = vector.load %arg3[%c0_6, %c0_7] : memref<1x128xf32, #tpu.memory_space<vmem>>, vector<1x128xf32>
    %9 = vector.broadcast %8 : vector<1x128xf32> to vector<128x128xf32>
    %10 = arith.mulf %9, %5 : vector<128x128xf32>
    %11 = arith.select %7, %5, %10 : vector<128x128xi1>, vector<128x128xf32>
    %12 = arith.truncf %11 : vector<128x128xf32> to vector<128x128xbf16>
    %c0_8 = arith.constant 0 : index
    %c0_9 = arith.constant 0 : index
    %13 = vector.load %arg4[%c0_8, %c0_9] : memref<288x128xbf16, #tpu.memory_space<vmem>>, vector<288x128xbf16>
    %cst_10 = arith.constant dense<0.000000e+00> : vector<288x128xf32>
    %14 = tpu.matmul %13, %12, %cst_10 {dimension_numbers = #tpu.dot_dimension_numbers<[1], [0], [0], [1], [0, 0, 1, 1], [], []>} : vector<288x128xbf16>, vector<128x128xbf16>, vector<288x128xf32> -> vector<288x128xf32>
    %15 = arith.truncf %14 : vector<288x128xf32> to vector<288x128xbf16>
    %16 = vector.shape_cast %15 : vector<288x128xbf16> to vector<9x32x128xbf16>
    %c0_11 = arith.constant 0 : index
    %c0_12 = arith.constant 0 : index
    %c0_13 = arith.constant 0 : index
    %17 = vector.load %arg5[%c0_11, %c0_12, %c0_13] : memref<9x128x128xbf16, #tpu.memory_space<vmem>>, vector<9x128x128xbf16>
    "tpu.trace_start"() <{level = 10 : i32, message = "tmk,tkn->tmn"}> : () -> ()
    %cst_14 = arith.constant dense<0.000000e+00> : vector<9x32x128xf32>
    %18 = tpu.matmul %16, %17, %cst_14 {dimension_numbers = #tpu.dot_dimension_numbers<[2], [1], [1], [2], [0, 0, 0, 1, 1, 2], [0], [0]>} : vector<9x32x128xbf16>, vector<9x128x128xbf16>, vector<9x32x128xf32> -> vector<9x32x128xf32>
    "tpu.trace_stop"() : () -> ()
    %cst_15 = arith.constant dense<0.000000e+00> : vector<32x128xf32>
    %19 = vector.multi_reduction <add>, %18, %cst_15 [0] : vector<9x32x128xf32> to vector<32x128xf32>
    %c0_16 = arith.constant 0 : index
    %c0_17 = arith.constant 0 : index
    %20 = vector.load %arg6[%c0_16, %c0_17] : memref<1x128xf32, #tpu.memory_space<vmem>>, vector<1x128xf32>
    %21 = vector.broadcast %20 : vector<1x128xf32> to vector<32x128xf32>
    %22 = arith.addf %19, %21 : vector<32x128xf32>
    %cst_18 = arith.constant 0.000000e+00 : f32
    %23 = vector.broadcast %cst_18 : f32 to vector<32x128xf32>
    %24 = arith.cmpf ogt, %22, %23 : vector<32x128xf32>
    %c0_19 = arith.constant 0 : index
    %c0_20 = arith.constant 0 : index
    %25 = vector.load %arg7[%c0_19, %c0_20] : memref<1x128xf32, #tpu.memory_space<vmem>>, vector<1x128xf32>
    %26 = vector.broadcast %25 : vector<1x128xf32> to vector<32x128xf32>
    %27 = arith.mulf %26, %22 : vector<32x128xf32>
    %28 = arith.select %24, %22, %27 : vector<32x128xi1>, vector<32x128xf32>
    %c0_21 = arith.constant 0 : index
    %c0_22 = arith.constant 0 : index
    %29 = vector.load %arg8[%c0_21, %c0_22] : memref<256x32xf32, #tpu.memory_space<vmem>>, vector<256x32xf32>
    %cst_23 = arith.constant dense<0.000000e+00> : vector<256x128xf32>
    %30 = tpu.matmul %29, %28, %cst_23 {dimension_numbers = #tpu.dot_dimension_numbers<[1], [0], [0], [1], [0, 0, 1, 1], [], []>} : vector<256x32xf32>, vector<32x128xf32>, vector<256x128xf32> -> vector<256x128xf32>
    %31 = arith.truncf %30 : vector<256x128xf32> to vector<256x128xbf16>
    %32 = vector.shape_cast %31 : vector<256x128xbf16> to vector<16x16x128xbf16>
    %c0_24 = arith.constant 0 : index
    %c0_25 = arith.constant 0 : index
    %c0_26 = arith.constant 0 : index
    %33 = vector.load %arg9[%c0_24, %c0_25, %c0_26] : memref<16x128x128xbf16, #tpu.memory_space<vmem>>, vector<16x128x128xbf16>
    "tpu.trace_start"() <{level = 10 : i32, message = "sbk,skn->sbn"}> : () -> ()
    %cst_27 = arith.constant dense<0.000000e+00> : vector<16x16x128xf32>
    %34 = tpu.matmul %32, %33, %cst_27 {dimension_numbers = #tpu.dot_dimension_numbers<[2], [1], [1], [2], [0, 0, 0, 1, 1, 2], [0], [0]>} : vector<16x16x128xbf16>, vector<16x128x128xbf16>, vector<16x16x128xf32> -> vector<16x16x128xf32>
    "tpu.trace_stop"() : () -> ()
    %cst_28 = arith.constant dense<0.000000e+00> : vector<16x128xf32>
    %35 = vector.multi_reduction <add>, %34, %cst_28 [0] : vector<16x16x128xf32> to vector<16x128xf32>
    %c0_29 = arith.constant 0 : index
    %c0_30 = arith.constant 0 : index
    %36 = vector.load %arg10[%c0_29, %c0_30] : memref<1x128xf32, #tpu.memory_space<vmem>>, vector<1x128xf32>
    %37 = vector.broadcast %36 : vector<1x128xf32> to vector<16x128xf32>
    %38 = arith.addf %35, %37 : vector<16x128xf32>
    %39 = tpu.iota {dimensions = array<i32: 0>} : vector<16x128xi32>
    %40 = tpu.iota {dimensions = array<i32: 1>} : vector<16x128xi32>
    %c10_i32 = arith.constant 10 : i32
    %41 = vector.broadcast %c10_i32 : i32 to vector<16x128xi32>
    %42 = arith.cmpi slt, %40, %41 : vector<16x128xi32>
    %cst_31 = arith.constant -1.000000e+30 : f32
    %43 = vector.broadcast %cst_31 : f32 to vector<16x128xf32>
    %44 = arith.select %42, %38, %43 : vector<16x128xi1>, vector<16x128xf32>
    %cst_32 = arith.constant dense<0xFF800000> : vector<16xf32>
    %45 = vector.multi_reduction <maximumf>, %44, %cst_32 [1] : vector<16x128xf32> to vector<16xf32>
    %46 = vector.shape_cast %45 : vector<16xf32> to vector<16x1xf32>
    %47 = vector.broadcast %46 : vector<16x1xf32> to vector<16x128xf32>
    %48 = arith.subf %44, %47 : vector<16x128xf32>
    %49 = math.exp %48 : vector<16x128xf32>
    %cst_33 = arith.constant dense<0.000000e+00> : vector<16xf32>
    %50 = vector.multi_reduction <add>, %49, %cst_33 [1] : vector<16x128xf32> to vector<16xf32>
    %51 = vector.shape_cast %50 : vector<16xf32> to vector<16x1xf32>
    %52 = math.log %51 : vector<16x1xf32>
    %cst_34 = arith.constant 0.000000e+00 : f32
    %53 = vector.broadcast %cst_34 : f32 to vector<16x128xf32>
    %c0_i32 = arith.constant 0 : i32
    %54 = vector.broadcast %c0_i32 : i32 to vector<16x128xi32>
    %55 = arith.cmpi eq, %39, %54 : vector<16x128xi32>
    %c0_35 = arith.constant 0 : index
    %56 = memref.load %arg11[%c0_35] : memref<2xi32, #tpu.memory_space<smem>>
    %57 = vector.broadcast %56 : i32 to vector<16x128xi32>
    %58 = arith.cmpi eq, %40, %57 : vector<16x128xi32>
    %59 = arith.andi %55, %58 : vector<16x128xi1>
    %60 = arith.extui %59 : vector<16x128xi1> to vector<16x128xi32>
    %61 = arith.sitofp %60 : vector<16x128xi32> to vector<16x128xf32>
    %62 = arith.addf %53, %61 : vector<16x128xf32>
    %c1_i32 = arith.constant 1 : i32
    %63 = vector.broadcast %c1_i32 : i32 to vector<16x128xi32>
    %64 = arith.cmpi eq, %39, %63 : vector<16x128xi32>
    %c1 = arith.constant 1 : index
    %65 = memref.load %arg11[%c1] : memref<2xi32, #tpu.memory_space<smem>>
    %66 = vector.broadcast %65 : i32 to vector<16x128xi32>
    %67 = arith.cmpi eq, %40, %66 : vector<16x128xi32>
    %68 = arith.andi %64, %67 : vector<16x128xi1>
    %69 = arith.extui %68 : vector<16x128xi1> to vector<16x128xi32>
    %70 = arith.sitofp %69 : vector<16x128xi32> to vector<16x128xf32>
    %71 = arith.addf %62, %70 : vector<16x128xf32>
    %72 = arith.mulf %71, %44 : vector<16x128xf32>
    %cst_36 = arith.constant dense<0.000000e+00> : vector<16xf32>
    %73 = vector.multi_reduction <add>, %72, %cst_36 [1] : vector<16x128xf32> to vector<16xf32>
    %74 = vector.shape_cast %73 : vector<16xf32> to vector<16x1xf32>
    %75 = arith.addf %46, %52 : vector<16x1xf32>
    %76 = arith.subf %75, %74 : vector<16x1xf32>
    %77 = tpu.iota {dimensions = array<i32: 0>} : vector<16x1xi32>
    %c2_i32 = arith.constant 2 : i32
    %78 = vector.broadcast %c2_i32 : i32 to vector<16x1xi32>
    %79 = arith.cmpi slt, %77, %78 : vector<16x1xi32>
    %cst_37 = arith.constant 0.000000e+00 : f32
    %80 = vector.broadcast %cst_37 : f32 to vector<16x1xf32>
    %81 = arith.select %79, %76, %80 : vector<16x1xi1>, vector<16x1xf32>
    %82 = vector.shape_cast %81 : vector<16x1xf32> to vector<1x16x1xf32>
    %cst_38 = arith.constant dense<0.000000e+00> : vector<1xf32>
    %83 = vector.multi_reduction <add>, %82, %cst_38 [1, 2] : vector<1x16x1xf32> to vector<1xf32>
    %84 = vector.shape_cast %83 : vector<1xf32> to vector<1x1x1xf32>
    %85 = vector.extract %84[0, 0, 0] : f32 from vector<1x1x1xf32>
    %cst_39 = arith.constant 5.000000e-01 : f32
    %86 = arith.mulf %85, %cst_39 : f32
    %c2_i32_40 = arith.constant 2 : i32
    %87 = vector.broadcast %c2_i32_40 : i32 to vector<16x128xi32>
    %88 = arith.cmpi slt, %39, %87 : vector<16x128xi32>
    %89 = vector.broadcast %86 : f32 to vector<16x128xf32>
    %90 = arith.select %88, %38, %89 : vector<16x128xi1>, vector<16x128xf32>
    %c0_41 = arith.constant 0 : index
    %c0_42 = arith.constant 0 : index
    %91 = vector.load %arg12[%c0_41, %c0_42] : memref<16x128xf32, #tpu.memory_space<vmem>>, vector<16x128xf32>
    tpu.vector_store %arg12[%c0_41, %c0_42], %90 {strides = array<i32>} : memref<16x128xf32, #tpu.memory_space<vmem>>, vector<16x128xf32>,
    return
  }
}

</mosaic_0001>

<llo_original>
// kernel: create_model_forward.1
$region0: #{create_model_forward.1}
  #allocation0 [shape = 'u32[]', space=smem, size = 0x4, offset = 0x4, fixed_abs, tag = 'smem constant byte address 0x4 - core index']
  #allocation1 [shape = 'u32[72,128]{1,0:T(1,128)}', space=vmem, size = 0x9000, scoped, tag = 'internal scratch']
  %s0 = inlined_call_operand.vmem [shape: bf16[128,32], index: 0, kind: input, shape index: {}]
  %s1 = inlined_call_operand.vmem [shape: bf16[32,128], index: 1, kind: input, shape index: {}]
  %s2 = inlined_call_operand.vmem [shape: f32[1,128], index: 2, kind: input, shape index: {}]
  %s3 = inlined_call_operand.vmem [shape: f32[1,128], index: 3, kind: input, shape index: {}]
  %s4 = inlined_call_operand.vmem [shape: bf16[288,128], index: 4, kind: input, shape index: {}]
  %s5 = inlined_call_operand.vmem [shape: bf16[9,128,128], index: 5, kind: input, shape index: {}]
  %s6 = inlined_call_operand.vmem [shape: f32[1,128], index: 6, kind: input, shape index: {}]
  %s7 = inlined_call_operand.vmem [shape: f32[1,128], index: 7, kind: input, shape index: {}]
  %s8 = inlined_call_operand.vmem [shape: f32[256,32], index: 8, kind: input, shape index: {}]
  %s9 = inlined_call_operand.vmem [shape: bf16[16,128,128], index: 9, kind: input, shape index: {}]
  %s10 = inlined_call_operand.vmem [shape: f32[1,128], index: 10, kind: input, shape index: {}]
  %s11 = inlined_call_operand.vmem [shape: s32[2], index: 11, kind: input, shape index: {}]
  %s12 = inlined_call_operand.vmem [shape: f32[16,128], index: 12, kind: output, shape index: {}]
  %s13 = sld [smem:[#allocation0]]
  $region62: #{create_model_forward.1} parent=0
    _
  %s15 = ssub.s32 1, %s13
  %s16 = scalar_select 0, %s15, %s13
  $region1: #{create_model_forward.1} parent=0
    #allocation2 [shape = 'u8[512]{0}', space=smem, size = 0x200, scoped, tag = 'input window, operand 11, single buffered']
    #allocation3 [shape = 's32[1]{0}', space=sflag, size = 0x4, scoped, tag = 'scoped memory for create_model_forward.1']
    %17 = vsyncpa [#allocation3], 0
    // Predicated region
    $region2: #{create_model_forward.1} parent=1 // pred_check
      _
    $region3: #{create_model_forward.1} parent=1 // pred_check_branch
      %19 = sbr.rel (0) target = $region5
    $region4: #{create_model_forward.1} parent=1 // pred_region
      _
    $region5: #{create_model_forward.1} parent=1 // pred_fallthru
      _
    // Predicated region
    $region6: #{create_model_forward.1} parent=1 // pred_check
      _
    $region7: #{create_model_forward.1} parent=1 // pred_check_branch
      %21 = sbr.rel (0) target = $region9
    $region8: #{create_model_forward.1} parent=1 // pred_region
      _
    $region9: #{create_model_forward.1} parent=1 // pred_fallthru
      _
    // Predicated region
    $region10: #{create_model_forward.1} parent=1 // pred_check
      _
    $region11: #{create_model_forward.1} parent=1 // pred_check_branch
      %23 = sbr.rel (0) target = $region13
    $region12: #{create_model_forward.1} parent=1 // pred_region
      _
    $region13: #{create_model_forward.1} parent=1 // pred_fallthru
      _
    // Predicated region
    $region14: #{create_model_forward.1} parent=1 // pred_check
      _
    $region15: #{create_model_forward.1} parent=1 // pred_check_branch
      %25 = sbr.rel (0) target = $region17
    $region16: #{create_model_forward.1} parent=1 // pred_region
      _
    $region17: #{create_model_forward.1} parent=1 // pred_fallthru
      _
    // Predicated region
    $region18: #{create_model_forward.1} parent=1 // pred_check
      _
    $region19: #{create_model_forward.1} parent=1 // pred_check_branch
      %27 = sbr.rel (0) target = $region21
    $region20: #{create_model_forward.1} parent=1 // pred_region
      _
    $region21: #{create_model_forward.1} parent=1 // pred_fallthru
      _
    // Predicated region
    $region22: #{create_model_forward.1} parent=1 // pred_check
      _
    $region23: #{create_model_forward.1} parent=1 // pred_check_branch
      %29 = sbr.rel (0) target = $region25
    $region24: #{create_model_forward.1} parent=1 // pred_region
      _
    $region25: #{create_model_forward.1} parent=1 // pred_fallthru
      _
    // Predicated region
    $region26: #{create_model_forward.1} parent=1 // pred_check
      _
    $region27: #{create_model_forward.1} parent=1 // pred_check_branch
      %31 = sbr.rel (0) target = $region29
    $region28: #{create_model_forward.1} parent=1 // pred_region
      _
    $region29: #{create_model_forward.1} parent=1 // pred_fallthru
      _
    // Predicated region
    $region30: #{create_model_forward.1} parent=1 // pred_check
      _
    $region31: #{create_model_forward.1} parent=1 // pred_check_branch
      %33 = sbr.rel (0) target = $region33
    $region32: #{create_model_forward.1} parent=1 // pred_region
      _
    $region33: #{create_model_forward.1} parent=1 // pred_fallthru
      _
    // Predicated region
    $region34: #{create_model_forward.1} parent=1 // pred_check
      _
    $region35: #{create_model_forward.1} parent=1 // pred_check_branch
      %35 = sbr.rel (0) target = $region37
    $region36: #{create_model_forward.1} parent=1 // pred_region
      _
    $region37: #{create_model_forward.1} parent=1 // pred_fallthru
      _
    // Predicated region
    $region38: #{create_model_forward.1} parent=1 // pred_check
      _
    $region39: #{create_model_forward.1} parent=1 // pred_check_branch
      %37 = sbr.rel (0) target = $region41
    $region40: #{create_model_forward.1} parent=1 // pred_region
      _
    $region41: #{create_model_forward.1} parent=1 // pred_fallthru
      _
    // Predicated region
    $region42: #{create_model_forward.1} parent=1 // pred_check
      _
    $region43: #{create_model_forward.1} parent=1 // pred_check_branch
      %39 = sbr.rel (0) target = $region45
    $region44: #{create_model_forward.1} parent=1 // pred_region
      _
    $region45: #{create_model_forward.1} parent=1 // pred_fallthru
      _
    // Predicated region
    $region46: #{create_model_forward.1} parent=1 // pred_check
      _
    $region47: #{create_model_forward.1} parent=1 // pred_check_branch
      %41 = sbr.rel (0) target = $region49
    $region48: #{create_model_forward.1} parent=1 // pred_region
      %43 = vsyncadd [#allocation3], 0
      %s45 = sshll.u32 %s11, 4
      %s46 = int_to_ptr.vmem [resolvable:$true] %s45
      %48 = dma.vmem_to_smem %s46, 16, [#allocation2], [#allocation3]
    $region49: #{create_model_forward.1} parent=1 // pred_fallthru
      _
    // Predicated region
    $region50: #{create_model_forward.1} parent=1 // pred_check
      _
    $region51: #{create_model_forward.1} parent=1 // pred_check_branch
      %50 = sbr.rel (0) target = $region53
    $region52: #{create_model_forward.1} parent=1 // pred_region
      %52 = dma.done [#allocation3], 16
    $region53: #{create_model_forward.1} parent=1 // pred_fallthru
      _
    %53 = sfence
    %v55 = vld [vmem:[%s0] sm:$0xf]
    %v56 = vld [vmem:[%s0 + $0x4] sm:$0xf]
    %v57 = vld [vmem:[%s0 + $0x8] sm:$0xf]
    %v58 = vld [vmem:[%s0 + $0xc] sm:$0xf]
    %v59 = vld [vmem:[%s0 + $0x10] sm:$0xf]
    %v60 = vld [vmem:[%s0 + $0x14] sm:$0xf]
    %v61 = vld [vmem:[%s0 + $0x18] sm:$0xf]
    %v62 = vld [vmem:[%s0 + $0x1c] sm:$0xf]
    %v63 = vld [vmem:[%s0 + $0x20] sm:$0xf]
    %v64 = vld [vmem:[%s0 + $0x24] sm:$0xf]
    %v65 = vld [vmem:[%s0 + $0x28] sm:$0xf]
    %v66 = vld [vmem:[%s0 + $0x2c] sm:$0xf]
    %v67 = vld [vmem:[%s0 + $0x30] sm:$0xf]
    %v68 = vld [vmem:[%s0 + $0x34] sm:$0xf]
    %v69 = vld [vmem:[%s0 + $0x38] sm:$0xf]
    %v70 = vld [vmem:[%s0 + $0x3c] sm:$0xf]
    %v71 = vld [vmem:[%s1] sm:$0xf]
    %v72 = vld [vmem:[%s1 + $0x4] sm:$0xf]
    %v73 = vld [vmem:[%s1 + $0x8] sm:$0xf]
    %v74 = vld [vmem:[%s1 + $0xc] sm:$0xf]
    %v75 = vld [vmem:[%s2] sm:$0x1]
    %v77 = vperm.slane %v75, 0
    %v95 = vunpack.c.l.b16 %v55
    %v96 = vunpack.c.l.b16 %v56
    %v97 = vunpack.c.l.b16 %v57
    %v98 = vunpack.c.l.b16 %v58
    %v99 = vunpack.c.l.b16 %v59
    %v100 = vunpack.c.l.b16 %v60
    %v101 = vunpack.c.l.b16 %v61
    %v102 = vunpack.c.l.b16 %v62
    %v103 = vunpack.c.l.b16 %v63
    %v104 = vunpack.c.l.b16 %v64
    %v105 = vunpack.c.l.b16 %v65
    %v106 = vunpack.c.l.b16 %v66
    %v107 = vunpack.c.l.b16 %v67
    %v108 = vunpack.c.l.b16 %v68
    %v109 = vunpack.c.l.b16 %v69
    %v110 = vunpack.c.l.b16 %v70
    %v111 = vpack.c.b16 %v96, %v95
    %v112 = vpack.c.b16 %v98, %v97
    %v113 = vpack.c.b16 %v100, %v99
    %v114 = vpack.c.b16 %v102, %v101
    %v115 = vpack.c.b16 %v104, %v103
    %v116 = vpack.c.b16 %v106, %v105
    %v117 = vpack.c.b16 %v108, %v107
    %v118 = vpack.c.b16 %v110, %v109
    %v123 = vunpack.c.l.b16 %v71
    %v124 = vunpack.c.l.b16 %v72
    %v125 = vunpack.c.l.b16 %v73
    %v126 = vunpack.c.l.b16 %v74
    %v127 = vpack.c.b16 %v124, %v123
    %v128 = vpack.c.b16 %v126, %v125
    %vm131 = vcmask 261120
    %v133 = vsel %vm131, %v111, 0
    %v136 = vsel %vm131, %v112, 0
    %v139 = vsel %vm131, %v113, 0
    %v142 = vsel %vm131, %v114, 0
    %v145 = vsel %vm131, %v115, 0
    %v148 = vsel %vm131, %v116, 0
    %v151 = vsel %vm131, %v117, 0
    %v154 = vsel %vm131, %v118, 0
    %156 = vmatpush.bf16.msra.mxu0 0
    %157 = vmatpush.bf16.msra.mxu0 0
    %158 = vmatpush.bf16.msra.mxu0 0
    %159 = vmatpush.bf16.msra.mxu0 0
    %160 = vmatpush.bf16.msra.mxu0 0
    %161 = vmatpush.bf16.msra.mxu0 0
    %162 = vmatpush.bf16.msra.mxu0 %v128
    %163 = vmatpush.bf16.msra.mxu0 %v127
    %164 = vmatmul.bf16.gmra.mxu0 %v133
    %v165 = vpop.f32.mrf.mxu0
    %v166 = vadd.f32 %v77, %v165
    %v167 = vpop.f32.mrf.mxu0
    %v168 = vadd.f32 %v77, %v167
    %169 = vmatmul.bf16.gmra.mxu0 %v136
    %v170 = vpop.f32.mrf.mxu0
    %v171 = vadd.f32 %v77, %v170
    %v172 = vpop.f32.mrf.mxu0
    %v173 = vadd.f32 %v77, %v172
    %174 = vmatmul.bf16.gmra.mxu0 %v139
    %v175 = vpop.f32.mrf.mxu0
    %v176 = vadd.f32 %v77, %v175
    %v177 = vpop.f32.mrf.mxu0
    %v178 = vadd.f32 %v77, %v177
    %179 = vmatmul.bf16.gmra.mxu0 %v142
    %v180 = vpop.f32.mrf.mxu0
    %v181 = vadd.f32 %v77, %v180
    %v182 = vpop.f32.mrf.mxu0
    %v183 = vadd.f32 %v77, %v182
    %184 = vmatmul.bf16.gmra.mxu0 %v145
    %v185 = vpop.f32.mrf.mxu0
    %v186 = vadd.f32 %v77, %v185
    %v187 = vpop.f32.mrf.mxu0
    %v188 = vadd.f32 %v77, %v187
    %189 = vmatmul.bf16.gmra.mxu0 %v148
    %v190 = vpop.f32.mrf.mxu0
    %v191 = vadd.f32 %v77, %v190
    %v192 = vpop.f32.mrf.mxu0
    %v193 = vadd.f32 %v77, %v192
    %194 = vmatmul.bf16.gmra.mxu0 %v151
    %v195 = vpop.f32.mrf.mxu0
    %v196 = vadd.f32 %v77, %v195
    %v197 = vpop.f32.mrf.mxu0
    %v198 = vadd.f32 %v77, %v197
    %199 = vmatmul.bf16.gmra.mxu0 %v154
    %v200 = vpop.f32.mrf.mxu0
    %v201 = vadd.f32 %v77, %v200
    %v202 = vpop.f32.mrf.mxu0
    %v203 = vadd.f32 %v77, %v202
    %204 = vdwg.mxu0
    %vm205 = vcmp.gt.f32.partialorder %v166, 0.0
    %vm206 = vcmp.gt.f32.partialorder %v168, 0.0
    %vm207 = vcmp.gt.f32.partialorder %v171, 0.0
    %vm208 = vcmp.gt.f32.partialorder %v173, 0.0
    %vm209 = vcmp.gt.f32.partialorder %v176, 0.0
    %vm210 = vcmp.gt.f32.partialorder %v178, 0.0
    %vm211 = vcmp.gt.f32.partialorder %v181, 0.0
    %vm212 = vcmp.gt.f32.partialorder %v183, 0.0
    %vm213 = vcmp.gt.f32.partialorder %v186, 0.0
    %vm214 = vcmp.gt.f32.partialorder %v188, 0.0
    %vm215 = vcmp.gt.f32.partialorder %v191, 0.0
    %vm216 = vcmp.gt.f32.partialorder %v193, 0.0
    %vm217 = vcmp.gt.f32.partialorder %v196, 0.0
    %vm218 = vcmp.gt.f32.partialorder %v198, 0.0
    %vm219 = vcmp.gt.f32.partialorder %v201, 0.0
    %vm220 = vcmp.gt.f32.partialorder %v203, 0.0
    %v221 = vld [vmem:[%s3] sm:$0x1]
    %v223 = vperm.slane %v221, 0
    %v225 = vmul.f32 %v223, %v166
    %v226 = vmul.f32 %v223, %v168
    %v227 = vmul.f32 %v223, %v171
    %v228 = vmul.f32 %v223, %v173
    %v229 = vmul.f32 %v223, %v176
    %v230 = vmul.f32 %v223, %v178
    %v231 = vmul.f32 %v223, %v181
    %v232 = vmul.f32 %v223, %v183
    %v233 = vmul.f32 %v223, %v186
    %v234 = vmul.f32 %v223, %v188
    %v235 = vmul.f32 %v223, %v191
    %v236 = vmul.f32 %v223, %v193
    %v237 = vmul.f32 %v223, %v196
    %v238 = vmul.f32 %v223, %v198
    %v239 = vmul.f32 %v223, %v201
    %v240 = vmul.f32 %v223, %v203
    %v241 = vsel %vm205, %v166, %v225
    %v242 = vsel %vm206, %v168, %v226
    %v243 = vsel %vm207, %v171, %v227
    %v244 = vsel %vm208, %v173, %v228
    %v245 = vsel %vm209, %v176, %v229
    %v246 = vsel %vm210, %v178, %v230
    %v247 = vsel %vm211, %v181, %v231
    %v248 = vsel %vm212, %v183, %v232
    %v249 = vsel %vm213, %v186, %v233
    %v250 = vsel %vm214, %v188, %v234
    %v251 = vsel %vm215, %v191, %v235
    %v252 = vsel %vm216, %v193, %v236
    %v253 = vsel %vm217, %v196, %v237
    %v254 = vsel %vm218, %v198, %v238
    %v255 = vsel %vm219, %v201, %v239
    %v256 = vsel %vm220, %v203, %v240
    %v257 = vpack.c.bf16 %v242, %v241
    %v258 = vpack.c.bf16 %v244, %v243
    %v259 = vpack.c.bf16 %v246, %v245
    %v260 = vpack.c.bf16 %v248, %v247
    %v261 = vpack.c.bf16 %v250, %v249
    %v262 = vpack.c.bf16 %v252, %v251
    %v263 = vpack.c.bf16 %v254, %v253
    %v264 = vpack.c.bf16 %v256, %v255
    %v265 = vld [vmem:[%s4] sm:$0xf]
    %v266 = vld [vmem:[%s4 + $0x4] sm:$0xf]
    %v267 = vld [vmem:[%s4 + $0x8] sm:$0xf]
    %v268 = vld [vmem:[%s4 + $0xc] sm:$0xf]
    %v269 = vld [vmem:[%s4 + $0x10] sm:$0xf]
    %v270 = vld [vmem:[%s4 + $0x14] sm:$0xf]
    %v271 = vld [vmem:[%s4 + $0x18] sm:$0xf]
    %v272 = vld [vmem:[%s4 + $0x1c] sm:$0xf]
    %v273 = vld [vmem:[%s4 + $0x20] sm:$0xf]
    %v274 = vld [vmem:[%s4 + $0x24] sm:$0xf]
    %v275 = vld [vmem:[%s4 + $0x28] sm:$0xf]
    %v276 = vld [vmem:[%s4 + $0x2c] sm:$0xf]
    %v277 = vld [vmem:[%s4 + $0x30] sm:$0xf]
    %v278 = vld [vmem:[%s4 + $0x34] sm:$0xf]
    %v279 = vld [vmem:[%s4 + $0x38] sm:$0xf]
    %v280 = vld [vmem:[%s4 + $0x3c] sm:$0xf]
    %v281 = vld [vmem:[%s4 + $0x40] sm:$0xf]
    %v282 = vld [vmem:[%s4 + $0x44] sm:$0xf]
    %v283 = vld [vmem:[%s4 + $0x48] sm:$0xf]
    %v284 = vld [vmem:[%s4 + $0x4c] sm:$0xf]
    %v285 = vld [vmem:[%s4 + $0x50] sm:$0xf]
    %v286 = vld [vmem:[%s4 + $0x54] sm:$0xf]
    %v287 = vld [vmem:[%s4 + $0x58] sm:$0xf]
    %v288 = vld [vmem:[%s4 + $0x5c] sm:$0xf]
    %v289 = vld [vmem:[%s4 + $0x60] sm:$0xf]
    %v290 = vld [vmem:[%s4 + $0x64] sm:$0xf]
    %v291 = vld [vmem:[%s4 + $0x68] sm:$0xf]
    %v292 = vld [vmem:[%s4 + $0x6c] sm:$0xf]
    %v293 = vld [vmem:[%s4 + $0x70] sm:$0xf]
    %v294 = vld [vmem:[%s4 + $0x74] sm:$0xf]
    %v295 = vld [vmem:[%s4 + $0x78] sm:$0xf]
    %v296 = vld [vmem:[%s4 + $0x7c] sm:$0xf]
    %v297 = vld [vmem:[%s4 + $0x80] sm:$0xf]
    %v298 = vld [vmem:[%s4 + $0x84] sm:$0xf]
    %v299 = vld [vmem:[%s4 + $0x88] sm:$0xf]
    %v300 = vld [vmem:[%s4 + $0x8c] sm:$0xf]
    %v337 = vunpack.c.l.b16 %v265
    %v338 = vunpack.c.l.b16 %v266
    %v339 = vunpack.c.l.b16 %v267
    %v340 = vunpack.c.l.b16 %v268
    %v341 = vunpack.c.l.b16 %v269
    %v342 = vunpack.c.l.b16 %v270
    %v343 = vunpack.c.l.b16 %v271
    %v344 = vunpack.c.l.b16 %v272
    %v345 = vunpack.c.l.b16 %v273
    %v346 = vunpack.c.l.b16 %v274
    %v347 = vunpack.c.l.b16 %v275
    %v348 = vunpack.c.l.b16 %v276
    %v349 = vunpack.c.l.b16 %v277
    %v350 = vunpack.c.l.b16 %v278
    %v351 = vunpack.c.l.b16 %v279
    %v352 = vunpack.c.l.b16 %v280
    %v353 = vunpack.c.l.b16 %v281
    %v354 = vunpack.c.l.b16 %v282
    %v355 = vunpack.c.l.b16 %v283
    %v356 = vunpack.c.l.b16 %v284
    %v357 = vunpack.c.l.b16 %v285
    %v358 = vunpack.c.l.b16 %v286
    %v359 = vunpack.c.l.b16 %v287
    %v360 = vunpack.c.l.b16 %v288
    %v361 = vunpack.c.l.b16 %v289
    %v362 = vunpack.c.l.b16 %v290
    %v363 = vunpack.c.l.b16 %v291
    %v364 = vunpack.c.l.b16 %v292
    %v365 = vunpack.c.l.b16 %v293
    %v366 = vunpack.c.l.b16 %v294
    %v367 = vunpack.c.l.b16 %v295
    %v368 = vunpack.c.l.b16 %v296
    %v369 = vunpack.c.l.b16 %v297
    %v370 = vunpack.c.l.b16 %v298
    %v371 = vunpack.c.l.b16 %v299
    %v372 = vunpack.c.l.b16 %v300
    %v373 = vpack.c.b16 %v338, %v337
    %v374 = vpack.c.b16 %v340, %v339
    %v375 = vpack.c.b16 %v342, %v341
    %v376 = vpack.c.b16 %v344, %v343
    %v377 = vpack.c.b16 %v346, %v345
    %v378 = vpack.c.b16 %v348, %v347
    %v379 = vpack.c.b16 %v350, %v349
    %v380 = vpack.c.b16 %v352, %v351
    %v381 = vpack.c.b16 %v354, %v353
    %v382 = vpack.c.b16 %v356, %v355
    %v383 = vpack.c.b16 %v358, %v357
    %v384 = vpack.c.b16 %v360, %v359
    %v385 = vpack.c.b16 %v362, %v361
    %v386 = vpack.c.b16 %v364, %v363
    %v387 = vpack.c.b16 %v366, %v365
    %v388 = vpack.c.b16 %v368, %v367
    %v389 = vpack.c.b16 %v370, %v369
    %v390 = vpack.c.b16 %v372, %v371
    %409 = vmatpush.bf16.msra.mxu0 %v264
    %410 = vmatpush.bf16.msra.mxu0 %v263
    %411 = vmatpush.bf16.msra.mxu0 %v262
    %412 = vmatpush.bf16.msra.mxu0 %v261
    %413 = vmatpush.bf16.msra.mxu0 %v260
    %414 = vmatpush.bf16.msra.mxu0 %v259
    %415 = vmatpush.bf16.msra.mxu0 %v258
    %416 = vmatpush.bf16.msra.mxu0 %v257
    %417 = vmatmul.bf16.gmra.mxu0 %v373
    %v418 = vpop.f32.mrf.mxu0
    %v419 = vadd.f32 0.0, %v418
    %v420 = vpop.f32.mrf.mxu0
    %v421 = vadd.f32 0.0, %v420
    %422 = vmatmul.bf16.gmra.mxu0 %v374
    %v423 = vpop.f32.mrf.mxu0
    %v424 = vadd.f32 0.0, %v423
    %v425 = vpop.f32.mrf.mxu0
    %v426 = vadd.f32 0.0, %v425
    %427 = vmatmul.bf16.gmra.mxu0 %v375
    %v428 = vpop.f32.mrf.mxu0
    %v429 = vadd.f32 0.0, %v428
    %v430 = vpop.f32.mrf.mxu0
    %v431 = vadd.f32 0.0, %v430
    %432 = vmatmul.bf16.gmra.mxu0 %v376
    %v433 = vpop.f32.mrf.mxu0
    %v434 = vadd.f32 0.0, %v433
    %v435 = vpop.f32.mrf.mxu0
    %v436 = vadd.f32 0.0, %v435
    %437 = vmatmul.bf16.gmra.mxu0 %v377
    %v438 = vpop.f32.mrf.mxu0
    %v439 = vadd.f32 0.0, %v438
    %v440 = vpop.f32.mrf.mxu0
    %v441 = vadd.f32 0.0, %v440
    %442 = vmatmul.bf16.gmra.mxu0 %v378
    %v443 = vpop.f32.mrf.mxu0
    %v444 = vadd.f32 0.0, %v443
    %v445 = vpop.f32.mrf.mxu0
    %v446 = vadd.f32 0.0, %v445
    %447 = vmatmul.bf16.gmra.mxu0 %v379
    %v448 = vpop.f32.mrf.mxu0
    %v449 = vadd.f32 0.0, %v448
    %v450 = vpop.f32.mrf.mxu0
    %v451 = vadd.f32 0.0, %v450
    %452 = vmatmul.bf16.gmra.mxu0 %v380
    %v453 = vpop.f32.mrf.mxu0
    %v454 = vadd.f32 0.0, %v453
    %v455 = vpop.f32.mrf.mxu0
    %v456 = vadd.f32 0.0, %v455
    %457 = vmatmul.bf16.gmra.mxu0 %v381
    %v458 = vpop.f32.mrf.mxu0
    %v459 = vadd.f32 0.0, %v458
    %v460 = vpop.f32.mrf.mxu0
    %v461 = vadd.f32 0.0, %v460
    %462 = vmatmul.bf16.gmra.mxu0 %v382
    %v463 = vpop.f32.mrf.mxu0
    %v464 = vadd.f32 0.0, %v463
    %v465 = vpop.f32.mrf.mxu0
    %v466 = vadd.f32 0.0, %v465
    %467 = vmatmul.bf16.gmra.mxu0 %v383
    %v468 = vpop.f32.mrf.mxu0
    %v469 = vadd.f32 0.0, %v468
    %v470 = vpop.f32.mrf.mxu0
    %v471 = vadd.f32 0.0, %v470
    %472 = vmatmul.bf16.gmra.mxu0 %v384
    %v473 = vpop.f32.mrf.mxu0
    %v474 = vadd.f32 0.0, %v473
    %v475 = vpop.f32.mrf.mxu0
    %v476 = vadd.f32 0.0, %v475
    %477 = vmatmul.bf16.gmra.mxu0 %v385
    %v478 = vpop.f32.mrf.mxu0
    %v479 = vadd.f32 0.0, %v478
    %v480 = vpop.f32.mrf.mxu0
    %v481 = vadd.f32 0.0, %v480
    %482 = vmatmul.bf16.gmra.mxu0 %v386
    %v483 = vpop.f32.mrf.mxu0
    %v484 = vadd.f32 0.0, %v483
    %v485 = vpop.f32.mrf.mxu0
    %v486 = vadd.f32 0.0, %v485
    %487 = vmatmul.bf16.gmra.mxu0 %v387
    %v488 = vpop.f32.mrf.mxu0
    %v489 = vadd.f32 0.0, %v488
    %v490 = vpop.f32.mrf.mxu0
    %v491 = vadd.f32 0.0, %v490
    %492 = vmatmul.bf16.gmra.mxu0 %v388
    %v493 = vpop.f32.mrf.mxu0
    %v494 = vadd.f32 0.0, %v493
    %v495 = vpop.f32.mrf.mxu0
    %v496 = vadd.f32 0.0, %v495
    %497 = vmatmul.bf16.gmra.mxu0 %v389
    %v498 = vpop.f32.mrf.mxu0
    %v499 = vadd.f32 0.0, %v498
    %v500 = vpop.f32.mrf.mxu0
    %v501 = vadd.f32 0.0, %v500
    %502 = vmatmul.bf16.gmra.mxu0 %v390
    %v503 = vpop.f32.mrf.mxu0
    %v504 = vadd.f32 0.0, %v503
    %v505 = vpop.f32.mrf.mxu0
    %v506 = vadd.f32 0.0, %v505
    %507 = vdwg.mxu0
    %v508 = vpack.c.bf16 %v419, %v419
    %v509 = vpack.c.bf16 %v421, %v421
    %v510 = vpack.c.bf16 %v424, %v424
    %v511 = vpack.c.bf16 %v426, %v426
    %v512 = vpack.c.bf16 %v429, %v429
    %v513 = vpack.c.bf16 %v431, %v431
    %v514 = vpack.c.bf16 %v434, %v434
    %v515 = vpack.c.bf16 %v436, %v436
    %v516 = vpack.c.bf16 %v439, %v439
    %v517 = vpack.c.bf16 %v441, %v441
    %v518 = vpack.c.bf16 %v444, %v444
    %v519 = vpack.c.bf16 %v446, %v446
    %v520 = vpack.c.bf16 %v449, %v449
    %v521 = vpack.c.bf16 %v451, %v451
    %v522 = vpack.c.bf16 %v454, %v454
    %v523 = vpack.c.bf16 %v456, %v456
    %v524 = vpack.c.bf16 %v459, %v459
    %v525 = vpack.c.bf16 %v461, %v461
    %v526 = vpack.c.bf16 %v464, %v464
    %v527 = vpack.c.bf16 %v466, %v466
    %v528 = vpack.c.bf16 %v469, %v469
    %v529 = vpack.c.bf16 %v471, %v471
    %v530 = vpack.c.bf16 %v474, %v474
    %v531 = vpack.c.bf16 %v476, %v476
    %v532 = vpack.c.bf16 %v479, %v479
    %v533 = vpack.c.bf16 %v481, %v481
    %v534 = vpack.c.bf16 %v484, %v484
    %v535 = vpack.c.bf16 %v486, %v486
    %v536 = vpack.c.bf16 %v489, %v489
    %v537 = vpack.c.bf16 %v491, %v491
    %v538 = vpack.c.bf16 %v494, %v494
    %v539 = vpack.c.bf16 %v496, %v496
    %v540 = vpack.c.bf16 %v499, %v499
    %v541 = vpack.c.bf16 %v501, %v501
    %v542 = vpack.c.bf16 %v504, %v504
    %v543 = vpack.c.bf16 %v506, %v506
    %v544 = vld [vmem:[%s5] sm:$0xf]
    %v545 = vld [vmem:[%s5 + $0x4] sm:$0xf]
    %v546 = vld [vmem:[%s5 + $0x8] sm:$0xf]
    %v547 = vld [vmem:[%s5 + $0xc] sm:$0xf]
    %v548 = vld [vmem:[%s5 + $0x10] sm:$0xf]
    %v549 = vld [vmem:[%s5 + $0x14] sm:$0xf]
    %v550 = vld [vmem:[%s5 + $0x18] sm:$0xf]
    %v551 = vld [vmem:[%s5 + $0x1c] sm:$0xf]
    %v552 = vld [vmem:[%s5 + $0x20] sm:$0xf]
    %v553 = vld [vmem:[%s5 + $0x24] sm:$0xf]
    %v554 = vld [vmem:[%s5 + $0x28] sm:$0xf]
    %v555 = vld [vmem:[%s5 + $0x2c] sm:$0xf]
    %v556 = vld [vmem:[%s5 + $0x30] sm:$0xf]
    %v557 = vld [vmem:[%s5 + $0x34] sm:$0xf]
    %v558 = vld [vmem:[%s5 + $0x38] sm:$0xf]
    %v559 = vld [vmem:[%s5 + $0x3c] sm:$0xf]
    %v560 = vld [vmem:[%s5 + $0x40] sm:$0xf]
    %v561 = vld [vmem:[%s5 + $0x44] sm:$0xf]
    %v562 = vld [vmem:[%s5 + $0x48] sm:$0xf]
    %v563 = vld [vmem:[%s5 + $0x4c] sm:$0xf]
    %v564 = vld [vmem:[%s5 + $0x50] sm:$0xf]
    %v565 = vld [vmem:[%s5 + $0x54] sm:$0xf]
    %v566 = vld [vmem:[%s5 + $0x58] sm:$0xf]
    %v567 = vld [vmem:[%s5 + $0x5c] sm:$0xf]
    %v568 = vld [vmem:[%s5 + $0x60] sm:$0xf]
    %v569 = vld [vmem:[%s5 + $0x64] sm:$0xf]
    %v570 = vld [vmem:[%s5 + $0x68] sm:$0xf]
    %v571 = vld [vmem:[%s5 + $0x6c] sm:$0xf]
    %v572 = vld [vmem:[%s5 + $0x70] sm:$0xf]
    %v573 = vld [vmem:[%s5 + $0x74] sm:$0xf]
    %v574 = vld [vmem:[%s5 + $0x78] sm:$0xf]
    %v575 = vld [vmem:[%s5 + $0x7c] sm:$0xf]
    %v576 = vld [vmem:[%s5 + $0x80] sm:$0xf]
    %v577 = vld [vmem:[%s5 + $0x84] sm:$0xf]
    %v578 = vld [vmem:[%s5 + $0x88] sm:$0xf]
    %v579 = vld [vmem:[%s5 + $0x8c] sm:$0xf]
    %v580 = vld [vmem:[%s5 + $0x90] sm:$0xf]
    %v581 = vld [vmem:[%s5 + $0x94] sm:$0xf]
    %v582 = vld [vmem:[%s5 + $0x98] sm:$0xf]
    %v583 = vld [vmem:[%s5 + $0x9c] sm:$0xf]
    %v584 = vld [vmem:[%s5 + $0xa0] sm:$0xf]
    %v585 = vld [vmem:[%s5 + $0xa4] sm:$0xf]
    %v586 = vld [vmem:[%s5 + $0xa8] sm:$0xf]
    %v587 = vld [vmem:[%s5 + $0xac] sm:$0xf]
    %v588 = vld [vmem:[%s5 + $0xb0] sm:$0xf]
    %v589 = vld [vmem:[%s5 + $0xb4] sm:$0xf]
    %v590 = vld [vmem:[%s5 + $0xb8] sm:$0xf]
    %v591 = vld [vmem:[%s5 + $0xbc] sm:$0xf]
    %v592 = vld [vmem:[%s5 + $0xc0] sm:$0xf]
    %v593 = vld [vmem:[%s5 + $0xc4] sm:$0xf]
    %v594 = vld [vmem:[%s5 + $0xc8] sm:$0xf]
    %v595 = vld [vmem:[%s5 + $0xcc] sm:$0xf]
    %v596 = vld [vmem:[%s5 + $0xd0] sm:$0xf]
    %v597 = vld [vmem:[%s5 + $0xd4] sm:$0xf]
    %v598 = vld [vmem:[%s5 + $0xd8] sm:$0xf]
    %v599 = vld [vmem:[%s5 + $0xdc] sm:$0xf]
    %v600 = vld [vmem:[%s5 + $0xe0] sm:$0xf]
    %v601 = vld [vmem:[%s5 + $0xe4] sm:$0xf]
    %v602 = vld [vmem:[%s5 + $0xe8] sm:$0xf]
    %v603 = vld [vmem:[%s5 + $0xec] sm:$0xf]
    %v604 = vld [vmem:[%s5 + $0xf0] sm:$0xf]
    %v605 = vld [vmem:[%s5 + $0xf4] sm:$0xf]
    %v606 = vld [vmem:[%s5 + $0xf8] sm:$0xf]
    %v607 = vld [vmem:[%s5 + $0xfc] sm:$0xf]
    %v608 = vld [vmem:[%s5 + $0x100] sm:$0xf]
    %v609 = vld [vmem:[%s5 + $0x104] sm:$0xf]
    %v610 = vld [vmem:[%s5 + $0x108] sm:$0xf]
    %v611 = vld [vmem:[%s5 + $0x10c] sm:$0xf]
    %v612 = vld [vmem:[%s5 + $0x110] sm:$0xf]
    %v613 = vld [vmem:[%s5 + $0x114] sm:$0xf]
    %v614 = vld [vmem:[%s5 + $0x118] sm:$0xf]
    %v615 = vld [vmem:[%s5 + $0x11c] sm:$0xf]
    %v616 = vld [vmem:[%s5 + $0x120] sm:$0xf]
    %v617 = vld [vmem:[%s5 + $0x124] sm:$0xf]
    %v618 = vld [vmem:[%s5 + $0x128] sm:$0xf]
    %v619 = vld [vmem:[%s5 + $0x12c] sm:$0xf]
    %v620 = vld [vmem:[%s5 + $0x130] sm:$0xf]
    %v621 = vld [vmem:[%s5 + $0x134] sm:$0xf]
    %v622 = vld [vmem:[%s5 + $0x138] sm:$0xf]
    %v623 = vld [vmem:[%s5 + $0x13c] sm:$0xf]
    %v624 = vld [vmem:[%s5 + $0x140] sm:$0xf]
    %v625 = vld [vmem:[%s5 + $0x144] sm:$0xf]
    %v626 = vld [vmem:[%s5 + $0x148] sm:$0xf]
    %v627 = vld [vmem:[%s5 + $0x14c] sm:$0xf]
    %v628 = vld [vmem:[%s5 + $0x150] sm:$0xf]
    %v629 = vld [vmem:[%s5 + $0x154] sm:$0xf]
    %v630 = vld [vmem:[%s5 + $0x158] sm:$0xf]
    %v631 = vld [vmem:[%s5 + $0x15c] sm:$0xf]
    %v632 = vld [vmem:[%s5 + $0x160] sm:$0xf]
    %v633 = vld [vmem:[%s5 + $0x164] sm:$0xf]
    %v634 = vld [vmem:[%s5 + $0x168] sm:$0xf]
    %v635 = vld [vmem:[%s5 + $0x16c] sm:$0xf]
    %v636 = vld [vmem:[%s5 + $0x170] sm:$0xf]
    %v637 = vld [vmem:[%s5 + $0x174] sm:$0xf]
    %v638 = vld [vmem:[%s5 + $0x178] sm:$0xf]
    %v639 = vld [vmem:[%s5 + $0x17c] sm:$0xf]
    %v640 = vld [vmem:[%s5 + $0x180] sm:$0xf]
    %v641 = vld [vmem:[%s5 + $0x184] sm:$0xf]
    %v642 = vld [vmem:[%s5 + $0x188] sm:$0xf]
    %v643 = vld [vmem:[%s5 + $0x18c] sm:$0xf]
    %v644 = vld [vmem:[%s5 + $0x190] sm:$0xf]
    %v645 = vld [vmem:[%s5 + $0x194] sm:$0xf]
    %v646 = vld [vmem:[%s5 + $0x198] sm:$0xf]
    %v647 = vld [vmem:[%s5 + $0x19c] sm:$0xf]
    %v648 = vld [vmem:[%s5 + $0x1a0] sm:$0xf]
    %v649 = vld [vmem:[%s5 + $0x1a4] sm:$0xf]
    %v650 = vld [vmem:[%s5 + $0x1a8] sm:$0xf]
    %v651 = vld [vmem:[%s5 + $0x1ac] sm:$0xf]
    %v652 = vld [vmem:[%s5 + $0x1b0] sm:$0xf]
    %v653 = vld [vmem:[%s5 + $0x1b4] sm:$0xf]
    %v654 = vld [vmem:[%s5 + $0x1b8] sm:$0xf]
    %v655 = vld [vmem:[%s5 + $0x1bc] sm:$0xf]
    %v656 = vld [vmem:[%s5 + $0x1c0] sm:$0xf]
    %v657 = vld [vmem:[%s5 + $0x1c4] sm:$0xf]
    %v658 = vld [vmem:[%s5 + $0x1c8] sm:$0xf]
    %v659 = vld [vmem:[%s5 + $0x1cc] sm:$0xf]
    %v660 = vld [vmem:[%s5 + $0x1d0] sm:$0xf]
    %v661 = vld [vmem:[%s5 + $0x1d4] sm:$0xf]
    %v662 = vld [vmem:[%s5 + $0x1d8] sm:$0xf]
    %v663 = vld [vmem:[%s5 + $0x1dc] sm:$0xf]
    %v664 = vld [vmem:[%s5 + $0x1e0] sm:$0xf]
    %v665 = vld [vmem:[%s5 + $0x1e4] sm:$0xf]
    %v666 = vld [vmem:[%s5 + $0x1e8] sm:$0xf]
    %v667 = vld [vmem:[%s5 + $0x1ec] sm:$0xf]
    %v668 = vld [vmem:[%s5 + $0x1f0] sm:$0xf]
    %v669 = vld [vmem:[%s5 + $0x1f4] sm:$0xf]
    %v670 = vld [vmem:[%s5 + $0x1f8] sm:$0xf]
    %v671 = vld [vmem:[%s5 + $0x1fc] sm:$0xf]
    %v672 = vld [vmem:[%s5 + $0x200] sm:$0xf]
    %v673 = vld [vmem:[%s5 + $0x204] sm:$0xf]
    %v674 = vld [vmem:[%s5 + $0x208] sm:$0xf]
    %v675 = vld [vmem:[%s5 + $0x20c] sm:$0xf]
    %v676 = vld [vmem:[%s5 + $0x210] sm:$0xf]
    %v677 = vld [vmem:[%s5 + $0x214] sm:$0xf]
    %v678 = vld [vmem:[%s5 + $0x218] sm:$0xf]
    %v679 = vld [vmem:[%s5 + $0x21c] sm:$0xf]
    %v680 = vld [vmem:[%s5 + $0x220] sm:$0xf]
    %v681 = vld [vmem:[%s5 + $0x224] sm:$0xf]
    %v682 = vld [vmem:[%s5 + $0x228] sm:$0xf]
    %v683 = vld [vmem:[%s5 + $0x22c] sm:$0xf]
    %v684 = vld [vmem:[%s5 + $0x230] sm:$0xf]
    %v685 = vld [vmem:[%s5 + $0x234] sm:$0xf]
    %v686 = vld [vmem:[%s5 + $0x238] sm:$0xf]
    %v687 = vld [vmem:[%s5 + $0x23c] sm:$0xf]
    %v692 = vunpack.c.l.b16 %v508
    %v693 = vunpack.c.l.b16 %v509
    %v694 = vunpack.c.l.b16 %v510
    %v695 = vunpack.c.l.b16 %v511
    %v696 = vpack.c.b16 %v693, %v692
    %v697 = vpack.c.b16 %v695, %v694
    %v716 = vunpack.c.l.b16 %v544
    %v717 = vunpack.c.l.b16 %v545
    %v718 = vunpack.c.l.b16 %v546
    %v719 = vunpack.c.l.b16 %v547
    %v720 = vunpack.c.l.b16 %v548
    %v721 = vunpack.c.l.b16 %v549
    %v722 = vunpack.c.l.b16 %v550
    %v723 = vunpack.c.l.b16 %v551
    %v724 = vunpack.c.l.b16 %v552
    %v725 = vunpack.c.l.b16 %v553
    %v726 = vunpack.c.l.b16 %v554
    %v727 = vunpack.c.l.b16 %v555
    %v728 = vunpack.c.l.b16 %v556
    %v729 = vunpack.c.l.b16 %v557
    %v730 = vunpack.c.l.b16 %v558
    %v731 = vunpack.c.l.b16 %v559
    %v732 = vpack.c.b16 %v717, %v716
    %v733 = vpack.c.b16 %v719, %v718
    %v734 = vpack.c.b16 %v721, %v720
    %v735 = vpack.c.b16 %v723, %v722
    %v736 = vpack.c.b16 %v725, %v724
    %v737 = vpack.c.b16 %v727, %v726
    %v738 = vpack.c.b16 %v729, %v728
    %v739 = vpack.c.b16 %v731, %v730
    %748 = vmatpush.bf16.msra.mxu0 %v739
    %749 = vmatpush.bf16.msra.mxu0 %v738
    %750 = vmatpush.bf16.msra.mxu0 %v737
    %751 = vmatpush.bf16.msra.mxu0 %v736
    %752 = vmatpush.bf16.msra.mxu0 %v735
    %753 = vmatpush.bf16.msra.mxu0 %v734
    %754 = vmatpush.bf16.msra.mxu0 %v733
    %755 = vmatpush.bf16.msra.mxu0 %v732
    %756 = vmatmul.bf16.gmra.mxu0 %v696
    %v757 = vpop.f32.mrf.mxu0
    %v758 = vadd.f32 0.0, %v757
    %v759 = vpop.f32.mrf.mxu0
    %v760 = vadd.f32 0.0, %v759
    %761 = vmatmul.bf16.gmra.mxu0 %v697
    %v762 = vpop.f32.mrf.mxu0
    %v763 = vadd.f32 0.0, %v762
    %v764 = vpop.f32.mrf.mxu0
    %v765 = vadd.f32 0.0, %v764
    %766 = vdwg.mxu0
    %v771 = vunpack.c.l.b16 %v512
    %v772 = vunpack.c.l.b16 %v513
    %v773 = vunpack.c.l.b16 %v514
    %v774 = vunpack.c.l.b16 %v515
    %v775 = vpack.c.b16 %v772, %v771
    %v776 = vpack.c.b16 %v774, %v773
    %v795 = vunpack.c.l.b16 %v560
    %v796 = vunpack.c.l.b16 %v561
    %v797 = vunpack.c.l.b16 %v562
    %v798 = vunpack.c.l.b16 %v563
    %v799 = vunpack.c.l.b16 %v564
    %v800 = vunpack.c.l.b16 %v565
    %v801 = vunpack.c.l.b16 %v566
    %v802 = vunpack.c.l.b16 %v567
    %v803 = vunpack.c.l.b16 %v568
    %v804 = vunpack.c.l.b16 %v569
    %v805 = vunpack.c.l.b16 %v570
    %v806 = vunpack.c.l.b16 %v571
    %v807 = vunpack.c.l.b16 %v572
    %v808 = vunpack.c.l.b16 %v573
    %v809 = vunpack.c.l.b16 %v574
    %v810 = vunpack.c.l.b16 %v575
    %v811 = vpack.c.b16 %v796, %v795
    %v812 = vpack.c.b16 %v798, %v797
    %v813 = vpack.c.b16 %v800, %v799
    %v814 = vpack.c.b16 %v802, %v801
    %v815 = vpack.c.b16 %v804, %v803
    %v816 = vpack.c.b16 %v806, %v805
    %v817 = vpack.c.b16 %v808, %v807
    %v818 = vpack.c.b16 %v810, %v809
    %827 = vmatpush.bf16.msra.mxu0 %v818
    %828 = vmatpush.bf16.msra.mxu0 %v817
    %829 = vmatpush.bf16.msra.mxu0 %v816
    %830 = vmatpush.bf16.msra.mxu0 %v815
    %831 = vmatpush.bf16.msra.mxu0 %v814
    %832 = vmatpush.bf16.msra.mxu0 %v813
    %833 = vmatpush.bf16.msra.mxu0 %v812
    %834 = vmatpush.bf16.msra.mxu0 %v811
    %835 = vmatmul.bf16.gmra.mxu0 %v775
    %v836 = vpop.f32.mrf.mxu0
    %v837 = vadd.f32 0.0, %v836
    %v838 = vpop.f32.mrf.mxu0
    %v839 = vadd.f32 0.0, %v838
    %840 = vmatmul.bf16.gmra.mxu0 %v776
    %v841 = vpop.f32.mrf.mxu0
    %v842 = vadd.f32 0.0, %v841
    %v843 = vpop.f32.mrf.mxu0
    %v844 = vadd.f32 0.0, %v843
    %845 = vdwg.mxu0
    %v850 = vunpack.c.l.b16 %v516
    %v851 = vunpack.c.l.b16 %v517
    %v852 = vunpack.c.l.b16 %v518
    %v853 = vunpack.c.l.b16 %v519
    %v854 = vpack.c.b16 %v851, %v850
    %v855 = vpack.c.b16 %v853, %v852
    %v874 = vunpack.c.l.b16 %v576
    %v875 = vunpack.c.l.b16 %v577
    %v876 = vunpack.c.l.b16 %v578
    %v877 = vunpack.c.l.b16 %v579
    %v878 = vunpack.c.l.b16 %v580
    %v879 = vunpack.c.l.b16 %v581
    %v880 = vunpack.c.l.b16 %v582
    %v881 = vunpack.c.l.b16 %v583
    %v882 = vunpack.c.l.b16 %v584
    %v883 = vunpack.c.l.b16 %v585
    %v884 = vunpack.c.l.b16 %v586
    %v885 = vunpack.c.l.b16 %v587
    %v886 = vunpack.c.l.b16 %v588
    %v887 = vunpack.c.l.b16 %v589
    %v888 = vunpack.c.l.b16 %v590
    %v889 = vunpack.c.l.b16 %v591
    %v890 = vpack.c.b16 %v875, %v874
    %v891 = vpack.c.b16 %v877, %v876
    %v892 = vpack.c.b16 %v879, %v878
    %v893 = vpack.c.b16 %v881, %v880
    %v894 = vpack.c.b16 %v883, %v882
    %v895 = vpack.c.b16 %v885, %v884
    %v896 = vpack.c.b16 %v887, %v886
    %v897 = vpack.c.b16 %v889, %v888
    %906 = vmatpush.bf16.msra.mxu0 %v897
    %907 = vmatpush.bf16.msra.mxu0 %v896
    %908 = vmatpush.bf16.msra.mxu0 %v895
    %909 = vmatpush.bf16.msra.mxu0 %v894
    %910 = vmatpush.bf16.msra.mxu0 %v893
    %911 = vmatpush.bf16.msra.mxu0 %v892
    %912 = vmatpush.bf16.msra.mxu0 %v891
    %913 = vmatpush.bf16.msra.mxu0 %v890
    %914 = vmatmul.bf16.gmra.mxu0 %v854
    %v915 = vpop.f32.mrf.mxu0
    %v916 = vadd.f32 0.0, %v915
    %v917 = vpop.f32.mrf.mxu0
    %v918 = vadd.f32 0.0, %v917
    %919 = vmatmul.bf16.gmra.mxu0 %v855
    %v920 = vpop.f32.mrf.mxu0
    %v921 = vadd.f32 0.0, %v920
    %v922 = vpop.f32.mrf.mxu0
    %v923 = vadd.f32 0.0, %v922
    %924 = vdwg.mxu0
    %v929 = vunpack.c.l.b16 %v520
    %v930 = vunpack.c.l.b16 %v521
    %v931 = vunpack.c.l.b16 %v522
    %v932 = vunpack.c.l.b16 %v523
    %v933 = vpack.c.b16 %v930, %v929
    %v934 = vpack.c.b16 %v932, %v931
    %v953 = vunpack.c.l.b16 %v592
    %v954 = vunpack.c.l.b16 %v593
    %v955 = vunpack.c.l.b16 %v594
    %v956 = vunpack.c.l.b16 %v595
    %v957 = vunpack.c.l.b16 %v596
    %v958 = vunpack.c.l.b16 %v597
    %v959 = vunpack.c.l.b16 %v598
    %v960 = vunpack.c.l.b16 %v599
    %v961 = vunpack.c.l.b16 %v600
    %v962 = vunpack.c.l.b16 %v601
    %v963 = vunpack.c.l.b16 %v602
    %v964 = vunpack.c.l.b16 %v603
    %v965 = vunpack.c.l.b16 %v604
    %v966 = vunpack.c.l.b16 %v605
    %v967 = vunpack.c.l.b16 %v606
    %v968 = vunpack.c.l.b16 %v607
    %v969 = vpack.c.b16 %v954, %v953
    %v970 = vpack.c.b16 %v956, %v955
    %v971 = vpack.c.b16 %v958, %v957
    %v972 = vpack.c.b16 %v960, %v959
    %v973 = vpack.c.b16 %v962, %v961
    %v974 = vpack.c.b16 %v964, %v963
    %v975 = vpack.c.b16 %v966, %v965
    %v976 = vpack.c.b16 %v968, %v967
    %985 = vmatpush.bf16.msra.mxu0 %v976
    %986 = vmatpush.bf16.msra.mxu0 %v975
    %987 = vmatpush.bf16.msra.mxu0 %v974
    %988 = vmatpush.bf16.msra.mxu0 %v973
    %989 = vmatpush.bf16.msra.mxu0 %v972
    %990 = vmatpush.bf16.msra.mxu0 %v971
    %991 = vmatpush.bf16.msra.mxu0 %v970
    %992 = vmatpush.bf16.msra.mxu0 %v969
    %993 = vmatmul.bf16.gmra.mxu0 %v933
    %v994 = vpop.f32.mrf.mxu0
    %v995 = vadd.f32 0.0, %v994
    %v996 = vpop.f32.mrf.mxu0
    %v997 = vadd.f32 0.0, %v996
    %998 = vmatmul.bf16.gmra.mxu0 %v934
    %v999 = vpop.f32.mrf.mxu0
    %v1000 = vadd.f32 0.0, %v999
    %v1001 = vpop.f32.mrf.mxu0
    %v1002 = vadd.f32 0.0, %v1001
    %1003 = vdwg.mxu0
    %v1008 = vunpack.c.l.b16 %v524
    %v1009 = vunpack.c.l.b16 %v525
    %v1010 = vunpack.c.l.b16 %v526
    %v1011 = vunpack.c.l.b16 %v527
    %v1012 = vpack.c.b16 %v1009, %v1008
    %v1013 = vpack.c.b16 %v1011, %v1010
    %v1032 = vunpack.c.l.b16 %v608
    %v1033 = vunpack.c.l.b16 %v609
    %v1034 = vunpack.c.l.b16 %v610
    %v1035 = vunpack.c.l.b16 %v611
    %v1036 = vunpack.c.l.b16 %v612
    %v1037 = vunpack.c.l.b16 %v613
    %v1038 = vunpack.c.l.b16 %v614
    %v1039 = vunpack.c.l.b16 %v615
    %v1040 = vunpack.c.l.b16 %v616
    %v1041 = vunpack.c.l.b16 %v617
    %v1042 = vunpack.c.l.b16 %v618
    %v1043 = vunpack.c.l.b16 %v619
    %v1044 = vunpack.c.l.b16 %v620
    %v1045 = vunpack.c.l.b16 %v621
    %v1046 = vunpack.c.l.b16 %v622
    %v1047 = vunpack.c.l.b16 %v623
    %v1048 = vpack.c.b16 %v1033, %v1032
    %v1049 = vpack.c.b16 %v1035, %v1034
    %v1050 = vpack.c.b16 %v1037, %v1036
    %v1051 = vpack.c.b16 %v1039, %v1038
    %v1052 = vpack.c.b16 %v1041, %v1040
    %v1053 = vpack.c.b16 %v1043, %v1042
    %v1054 = vpack.c.b16 %v1045, %v1044
    %v1055 = vpack.c.b16 %v1047, %v1046
    %1064 = vmatpush.bf16.msra.mxu0 %v1055
    %1065 = vmatpush.bf16.msra.mxu0 %v1054
    %1066 = vmatpush.bf16.msra.mxu0 %v1053
    %1067 = vmatpush.bf16.msra.mxu0 %v1052
    %1068 = vmatpush.bf16.msra.mxu0 %v1051
    %1069 = vmatpush.bf16.msra.mxu0 %v1050
    %1070 = vmatpush.bf16.msra.mxu0 %v1049
    %1071 = vmatpush.bf16.msra.mxu0 %v1048
    %1072 = vmatmul.bf16.gmra.mxu0 %v1012
    %v1073 = vpop.f32.mrf.mxu0
    %v1074 = vadd.f32 0.0, %v1073
    %v1075 = vpop.f32.mrf.mxu0
    %v1076 = vadd.f32 0.0, %v1075
    %1077 = vmatmul.bf16.gmra.mxu0 %v1013
    %v1078 = vpop.f32.mrf.mxu0
    %v1079 = vadd.f32 0.0, %v1078
    %v1080 = vpop.f32.mrf.mxu0
    %v1081 = vadd.f32 0.0, %v1080
    %1082 = vdwg.mxu0
    %v1087 = vunpack.c.l.b16 %v528
    %v1088 = vunpack.c.l.b16 %v529
    %v1089 = vunpack.c.l.b16 %v530
    %v1090 = vunpack.c.l.b16 %v531
    %v1091 = vpack.c.b16 %v1088, %v1087
    %v1092 = vpack.c.b16 %v1090, %v1089
    %v1111 = vunpack.c.l.b16 %v624
    %v1112 = vunpack.c.l.b16 %v625
    %v1113 = vunpack.c.l.b16 %v626
    %v1114 = vunpack.c.l.b16 %v627
    %v1115 = vunpack.c.l.b16 %v628
    %v1116 = vunpack.c.l.b16 %v629
    %v1117 = vunpack.c.l.b16 %v630
    %v1118 = vunpack.c.l.b16 %v631
    %v1119 = vunpack.c.l.b16 %v632
    %v1120 = vunpack.c.l.b16 %v633
    %v1121 = vunpack.c.l.b16 %v634
    %v1122 = vunpack.c.l.b16 %v635
    %v1123 = vunpack.c.l.b16 %v636
    %v1124 = vunpack.c.l.b16 %v637
    %v1125 = vunpack.c.l.b16 %v638
    %v1126 = vunpack.c.l.b16 %v639
    %v1127 = vpack.c.b16 %v1112, %v1111
    %v1128 = vpack.c.b16 %v1114, %v1113
    %v1129 = vpack.c.b16 %v1116, %v1115
    %v1130 = vpack.c.b16 %v1118, %v1117
    %v1131 = vpack.c.b16 %v1120, %v1119
    %v1132 = vpack.c.b16 %v1122, %v1121
    %v1133 = vpack.c.b16 %v1124, %v1123
    %v1134 = vpack.c.b16 %v1126, %v1125
    %1143 = vmatpush.bf16.msra.mxu0 %v1134
    %1144 = vmatpush.bf16.msra.mxu0 %v1133
    %1145 = vmatpush.bf16.msra.mxu0 %v1132
    %1146 = vmatpush.bf16.msra.mxu0 %v1131
    %1147 = vmatpush.bf16.msra.mxu0 %v1130
    %1148 = vmatpush.bf16.msra.mxu0 %v1129
    %1149 = vmatpush.bf16.msra.mxu0 %v1128
    %1150 = vmatpush.bf16.msra.mxu0 %v1127
    %1151 = vmatmul.bf16.gmra.mxu0 %v1091
    %v1152 = vpop.f32.mrf.mxu0
    %v1153 = vadd.f32 0.0, %v1152
    %v1154 = vpop.f32.mrf.mxu0
    %v1155 = vadd.f32 0.0, %v1154
    %1156 = vmatmul.bf16.gmra.mxu0 %v1092
    %v1157 = vpop.f32.mrf.mxu0
    %v1158 = vadd.f32 0.0, %v1157
    %v1159 = vpop.f32.mrf.mxu0
    %v1160 = vadd.f32 0.0, %v1159
    %1161 = vdwg.mxu0
    %v1166 = vunpack.c.l.b16 %v532
    %v1167 = vunpack.c.l.b16 %v533
    %v1168 = vunpack.c.l.b16 %v534
    %v1169 = vunpack.c.l.b16 %v535
    %v1170 = vpack.c.b16 %v1167, %v1166
    %v1171 = vpack.c.b16 %v1169, %v1168
    %v1190 = vunpack.c.l.b16 %v640
    %v1191 = vunpack.c.l.b16 %v641
    %v1192 = vunpack.c.l.b16 %v642
    %v1193 = vunpack.c.l.b16 %v643
    %v1194 = vunpack.c.l.b16 %v644
    %v1195 = vunpack.c.l.b16 %v645
    %v1196 = vunpack.c.l.b16 %v646
    %v1197 = vunpack.c.l.b16 %v647
    %v1198 = vunpack.c.l.b16 %v648
    %v1199 = vunpack.c.l.b16 %v649
    %v1200 = vunpack.c.l.b16 %v650
    %v1201 = vunpack.c.l.b16 %v651
    %v1202 = vunpack.c.l.b16 %v652
    %v1203 = vunpack.c.l.b16 %v653
    %v1204 = vunpack.c.l.b16 %v654
    %v1205 = vunpack.c.l.b16 %v655
    %v1206 = vpack.c.b16 %v1191, %v1190
    %v1207 = vpack.c.b16 %v1193, %v1192
    %v1208 = vpack.c.b16 %v1195, %v1194
    %v1209 = vpack.c.b16 %v1197, %v1196
    %v1210 = vpack.c.b16 %v1199, %v1198
    %v1211 = vpack.c.b16 %v1201, %v1200
    %v1212 = vpack.c.b16 %v1203, %v1202
    %v1213 = vpack.c.b16 %v1205, %v1204
    %1222 = vmatpush.bf16.msra.mxu0 %v1213
    %1223 = vmatpush.bf16.msra.mxu0 %v1212
    %1224 = vmatpush.bf16.msra.mxu0 %v1211
    %1225 = vmatpush.bf16.msra.mxu0 %v1210
    %1226 = vmatpush.bf16.msra.mxu0 %v1209
    %1227 = vmatpush.bf16.msra.mxu0 %v1208
    %1228 = vmatpush.bf16.msra.mxu0 %v1207
    %1229 = vmatpush.bf16.msra.mxu0 %v1206
    %1230 = vmatmul.bf16.gmra.mxu0 %v1170
    %v1231 = vpop.f32.mrf.mxu0
    %v1232 = vadd.f32 0.0, %v1231
    %v1233 = vpop.f32.mrf.mxu0
    %v1234 = vadd.f32 0.0, %v1233
    %1235 = vmatmul.bf16.gmra.mxu0 %v1171
    %v1236 = vpop.f32.mrf.mxu0
    %v1237 = vadd.f32 0.0, %v1236
    %v1238 = vpop.f32.mrf.mxu0
    %v1239 = vadd.f32 0.0, %v1238
    %1240 = vdwg.mxu0
    %v1245 = vunpack.c.l.b16 %v536
    %v1246 = vunpack.c.l.b16 %v537
    %v1247 = vunpack.c.l.b16 %v538
    %v1248 = vunpack.c.l.b16 %v539
    %v1249 = vpack.c.b16 %v1246, %v1245
    %v1250 = vpack.c.b16 %v1248, %v1247
    %v1269 = vunpack.c.l.b16 %v656
    %v1270 = vunpack.c.l.b16 %v657
    %v1271 = vunpack.c.l.b16 %v658
    %v1272 = vunpack.c.l.b16 %v659
    %v1273 = vunpack.c.l.b16 %v660
    %v1274 = vunpack.c.l.b16 %v661
    %v1275 = vunpack.c.l.b16 %v662
    %v1276 = vunpack.c.l.b16 %v663
    %v1277 = vunpack.c.l.b16 %v664
    %v1278 = vunpack.c.l.b16 %v665
    %v1279 = vunpack.c.l.b16 %v666
    %v1280 = vunpack.c.l.b16 %v667
    %v1281 = vunpack.c.l.b16 %v668
    %v1282 = vunpack.c.l.b16 %v669
    %v1283 = vunpack.c.l.b16 %v670
    %v1284 = vunpack.c.l.b16 %v671
    %v1285 = vpack.c.b16 %v1270, %v1269
    %v1286 = vpack.c.b16 %v1272, %v1271
    %v1287 = vpack.c.b16 %v1274, %v1273
    %v1288 = vpack.c.b16 %v1276, %v1275
    %v1289 = vpack.c.b16 %v1278, %v1277
    %v1290 = vpack.c.b16 %v1280, %v1279
    %v1291 = vpack.c.b16 %v1282, %v1281
    %v1292 = vpack.c.b16 %v1284, %v1283
    %1301 = vmatpush.bf16.msra.mxu0 %v1292
    %1302 = vmatpush.bf16.msra.mxu0 %v1291
    %1303 = vmatpush.bf16.msra.mxu0 %v1290
    %1304 = vmatpush.bf16.msra.mxu0 %v1289
    %1305 = vmatpush.bf16.msra.mxu0 %v1288
    %1306 = vmatpush.bf16.msra.mxu0 %v1287
    %1307 = vmatpush.bf16.msra.mxu0 %v1286
    %1308 = vmatpush.bf16.msra.mxu0 %v1285
    %1309 = vmatmul.bf16.gmra.mxu0 %v1249
    %v1310 = vpop.f32.mrf.mxu0
    %v1311 = vadd.f32 0.0, %v1310
    %v1312 = vpop.f32.mrf.mxu0
    %v1313 = vadd.f32 0.0, %v1312
    %1314 = vmatmul.bf16.gmra.mxu0 %v1250
    %v1315 = vpop.f32.mrf.mxu0
    %v1316 = vadd.f32 0.0, %v1315
    %v1317 = vpop.f32.mrf.mxu0
    %v1318 = vadd.f32 0.0, %v1317
    %1319 = vdwg.mxu0
    %v1324 = vunpack.c.l.b16 %v540
    %v1325 = vunpack.c.l.b16 %v541
    %v1326 = vunpack.c.l.b16 %v542
    %v1327 = vunpack.c.l.b16 %v543
    %v1328 = vpack.c.b16 %v1325, %v1324
    %v1329 = vpack.c.b16 %v1327, %v1326
    %v1348 = vunpack.c.l.b16 %v672
    %v1349 = vunpack.c.l.b16 %v673
    %v1350 = vunpack.c.l.b16 %v674
    %v1351 = vunpack.c.l.b16 %v675
    %v1352 = vunpack.c.l.b16 %v676
    %v1353 = vunpack.c.l.b16 %v677
    %v1354 = vunpack.c.l.b16 %v678
    %v1355 = vunpack.c.l.b16 %v679
    %v1356 = vunpack.c.l.b16 %v680
    %v1357 = vunpack.c.l.b16 %v681
    %v1358 = vunpack.c.l.b16 %v682
    %v1359 = vunpack.c.l.b16 %v683
    %v1360 = vunpack.c.l.b16 %v684
    %v1361 = vunpack.c.l.b16 %v685
    %v1362 = vunpack.c.l.b16 %v686
    %v1363 = vunpack.c.l.b16 %v687
    %v1364 = vpack.c.b16 %v1349, %v1348
    %v1365 = vpack.c.b16 %v1351, %v1350
    %v1366 = vpack.c.b16 %v1353, %v1352
    %v1367 = vpack.c.b16 %v1355, %v1354
    %v1368 = vpack.c.b16 %v1357, %v1356
    %v1369 = vpack.c.b16 %v1359, %v1358
    %v1370 = vpack.c.b16 %v1361, %v1360
    %v1371 = vpack.c.b16 %v1363, %v1362
    %1380 = vmatpush.bf16.msra.mxu0 %v1371
    %1381 = vmatpush.bf16.msra.mxu0 %v1370
    %1382 = vmatpush.bf16.msra.mxu0 %v1369
    %1383 = vmatpush.bf16.msra.mxu0 %v1368
    %1384 = vmatpush.bf16.msra.mxu0 %v1367
    %1385 = vmatpush.bf16.msra.mxu0 %v1366
    %1386 = vmatpush.bf16.msra.mxu0 %v1365
    %1387 = vmatpush.bf16.msra.mxu0 %v1364
    %1388 = vmatmul.bf16.gmra.mxu0 %v1328
    %v1389 = vpop.f32.mrf.mxu0
    %v1390 = vadd.f32 0.0, %v1389
    %v1391 = vpop.f32.mrf.mxu0
    %v1392 = vadd.f32 0.0, %v1391
    %1393 = vmatmul.bf16.gmra.mxu0 %v1329
    %v1394 = vpop.f32.mrf.mxu0
    %v1395 = vadd.f32 0.0, %v1394
    %v1396 = vpop.f32.mrf.mxu0
    %v1397 = vadd.f32 0.0, %v1396
    %1398 = vdwg.mxu0
    %v1399 = vadd.f32 %v758, %v837
    %v1400 = vadd.f32 %v1399, %v916
    %v1401 = vadd.f32 %v1400, %v995
    %v1402 = vadd.f32 %v1401, %v1074
    %v1403 = vadd.f32 %v1402, %v1153
    %v1404 = vadd.f32 %v1403, %v1232
    %v1405 = vadd.f32 %v1404, %v1311
    %v1406 = vadd.f32 %v1405, %v1390
    %v1407 = vadd.f32 %v760, %v839
    %v1408 = vadd.f32 %v1407, %v918
    %v1409 = vadd.f32 %v1408, %v997
    %v1410 = vadd.f32 %v1409, %v1076
    %v1411 = vadd.f32 %v1410, %v1155
    %v1412 = vadd.f32 %v1411, %v1234
    %v1413 = vadd.f32 %v1412, %v1313
    %v1414 = vadd.f32 %v1413, %v1392
    %v1415 = vadd.f32 %v763, %v842
    %v1416 = vadd.f32 %v1415, %v921
    %v1417 = vadd.f32 %v1416, %v1000
    %v1418 = vadd.f32 %v1417, %v1079
    %v1419 = vadd.f32 %v1418, %v1158
    %v1420 = vadd.f32 %v1419, %v1237
    %v1421 = vadd.f32 %v1420, %v1316
    %v1422 = vadd.f32 %v1421, %v1395
    %v1423 = vadd.f32 %v765, %v844
    %v1424 = vadd.f32 %v1423, %v923
    %v1425 = vadd.f32 %v1424, %v1002
    %v1426 = vadd.f32 %v1425, %v1081
    %v1427 = vadd.f32 %v1426, %v1160
    %v1428 = vadd.f32 %v1427, %v1239
    %v1429 = vadd.f32 %v1428, %v1318
    %v1430 = vadd.f32 %v1429, %v1397
    %v1431 = vld [vmem:[%s6] sm:$0x1]
    %v1433 = vperm.slane %v1431, 0
    %v1435 = vadd.f32 %v1406, %v1433
    %v1436 = vadd.f32 %v1414, %v1433
    %v1437 = vadd.f32 %v1422, %v1433
    %v1438 = vadd.f32 %v1430, %v1433
    %vm1439 = vcmp.gt.f32.partialorder %v1435, 0.0
    %vm1440 = vcmp.gt.f32.partialorder %v1436, 0.0
    %vm1441 = vcmp.gt.f32.partialorder %v1437, 0.0
    %vm1442 = vcmp.gt.f32.partialorder %v1438, 0.0
    %v1443 = vld [vmem:[%s7] sm:$0x1]
    %v1445 = vperm.slane %v1443, 0
    %v1447 = vmul.f32 %v1445, %v1435
    %v1448 = vmul.f32 %v1445, %v1436
    %v1449 = vmul.f32 %v1445, %v1437
    %v1450 = vmul.f32 %v1445, %v1438
    %v1451 = vsel %vm1439, %v1435, %v1447
    %v1452 = vsel %vm1440, %v1436, %v1448
    %v1453 = vsel %vm1441, %v1437, %v1449
    %v1454 = vsel %vm1442, %v1438, %v1450
    %v1455 = vld [vmem:[%s8] sm:$0xff]
    %v1456 = vld [vmem:[%s8 + $0x8] sm:$0xff]
    %v1457 = vld [vmem:[%s8 + $0x10] sm:$0xff]
    %v1458 = vld [vmem:[%s8 + $0x18] sm:$0xff]
    %v1459 = vld [vmem:[%s8 + $0x20] sm:$0xff]
    %v1460 = vld [vmem:[%s8 + $0x28] sm:$0xff]
    %v1461 = vld [vmem:[%s8 + $0x30] sm:$0xff]
    %v1462 = vld [vmem:[%s8 + $0x38] sm:$0xff]
    %v1463 = vld [vmem:[%s8 + $0x40] sm:$0xff]
    %v1464 = vld [vmem:[%s8 + $0x48] sm:$0xff]
    %v1465 = vld [vmem:[%s8 + $0x50] sm:$0xff]
    %v1466 = vld [vmem:[%s8 + $0x58] sm:$0xff]
    %v1467 = vld [vmem:[%s8 + $0x60] sm:$0xff]
    %v1468 = vld [vmem:[%s8 + $0x68] sm:$0xff]
    %v1469 = vld [vmem:[%s8 + $0x70] sm:$0xff]
    %v1470 = vld [vmem:[%s8 + $0x78] sm:$0xff]
    %v1471 = vld [vmem:[%s8 + $0x80] sm:$0xff]
    %v1472 = vld [vmem:[%s8 + $0x88] sm:$0xff]
    %v1473 = vld [vmem:[%s8 + $0x90] sm:$0xff]
    %v1474 = vld [vmem:[%s8 + $0x98] sm:$0xff]
    %v1475 = vld [vmem:[%s8 + $0xa0] sm:$0xff]
    %v1476 = vld [vmem:[%s8 + $0xa8] sm:$0xff]
    %v1477 = vld [vmem:[%s8 + $0xb0] sm:$0xff]
    %v1478 = vld [vmem:[%s8 + $0xb8] sm:$0xff]
    %v1479 = vld [vmem:[%s8 + $0xc0] sm:$0xff]
    %v1480 = vld [vmem:[%s8 + $0xc8] sm:$0xff]
    %v1481 = vld [vmem:[%s8 + $0xd0] sm:$0xff]
    %v1482 = vld [vmem:[%s8 + $0xd8] sm:$0xff]
    %v1483 = vld [vmem:[%s8 + $0xe0] sm:$0xff]
    %v1484 = vld [vmem:[%s8 + $0xe8] sm:$0xff]
    %v1485 = vld [vmem:[%s8 + $0xf0] sm:$0xff]
    %v1486 = vld [vmem:[%s8 + $0xf8] sm:$0xff]
    %v1488 = vsel %vm131, %v1455, 0
    %v1491 = vsel %vm131, %v1456, 0
    %v1494 = vsel %vm131, %v1457, 0
    %v1497 = vsel %vm131, %v1458, 0
    %v1500 = vsel %vm131, %v1459, 0
    %v1503 = vsel %vm131, %v1460, 0
    %v1506 = vsel %vm131, %v1461, 0
    %v1509 = vsel %vm131, %v1462, 0
    %v1512 = vsel %vm131, %v1463, 0
    %v1515 = vsel %vm131, %v1464, 0
    %v1518 = vsel %vm131, %v1465, 0
    %v1521 = vsel %vm131, %v1466, 0
    %v1524 = vsel %vm131, %v1467, 0
    %v1527 = vsel %vm131, %v1468, 0
    %v1530 = vsel %vm131, %v1469, 0
    %v1533 = vsel %vm131, %v1470, 0
    %v1536 = vsel %vm131, %v1471, 0
    %v1539 = vsel %vm131, %v1472, 0
    %v1542 = vsel %vm131, %v1473, 0
    %v1545 = vsel %vm131, %v1474, 0
    %v1548 = vsel %vm131, %v1475, 0
    %v1551 = vsel %vm131, %v1476, 0
    %v1554 = vsel %vm131, %v1477, 0
    %v1557 = vsel %vm131, %v1478, 0
    %v1560 = vsel %vm131, %v1479, 0
    %v1563 = vsel %vm131, %v1480, 0
    %v1566 = vsel %vm131, %v1481, 0
    %v1569 = vsel %vm131, %v1482, 0
    %v1572 = vsel %vm131, %v1483, 0
    %v1575 = vsel %vm131, %v1484, 0
    %v1578 = vsel %vm131, %v1485, 0
    %v1581 = vsel %vm131, %v1486, 0
    %1583 = vmatpush.msra.mxu0 0.0
    %1584 = vmatpush.msra.mxu0 0.0
    %1585 = vmatpush.msra.mxu0 0.0
    %1586 = vmatpush.msra.mxu0 0.0
    %1587 = vmatpush.msra.mxu0 0.0
    %1588 = vmatpush.msra.mxu0 0.0
    %1589 = vmatpush.msra.mxu0 0.0
    %1590 = vmatpush.msra.mxu0 0.0
    %1591 = vmatpush.msra.mxu0 0.0
    %1592 = vmatpush.msra.mxu0 0.0
    %1593 = vmatpush.msra.mxu0 0.0
    %1594 = vmatpush.msra.mxu0 0.0
    %1595 = vmatpush.msra.mxu0 %v1454
    %1596 = vmatpush.msra.mxu0 %v1453
    %1597 = vmatpush.msra.mxu0 %v1452
    %1598 = vmatpush.msra.mxu0 %v1451
    %1599 = vmatmul.f32.gmra.mxu0 %v1488
    %v1600 = vpop.f32.mrf.mxu0
    %v1601 = vadd.f32 0.0, %v1600
    %1602 = vmatmul.f32.gmra.mxu0 %v1491
    %v1603 = vpop.f32.mrf.mxu0
    %v1604 = vadd.f32 0.0, %v1603
    %1605 = vmatmul.f32.gmra.mxu0 %v1494
    %v1606 = vpop.f32.mrf.mxu0
    %v1607 = vadd.f32 0.0, %v1606
    %1608 = vmatmul.f32.gmra.mxu0 %v1497
    %v1609 = vpop.f32.mrf.mxu0
    %v1610 = vadd.f32 0.0, %v1609
    %1611 = vmatmul.f32.gmra.mxu0 %v1500
    %v1612 = vpop.f32.mrf.mxu0
    %v1613 = vadd.f32 0.0, %v1612
    %1614 = vmatmul.f32.gmra.mxu0 %v1503
    %v1615 = vpop.f32.mrf.mxu0
    %v1616 = vadd.f32 0.0, %v1615
    %1617 = vmatmul.f32.gmra.mxu0 %v1506
    %v1618 = vpop.f32.mrf.mxu0
    %v1619 = vadd.f32 0.0, %v1618
    %1620 = vmatmul.f32.gmra.mxu0 %v1509
    %v1621 = vpop.f32.mrf.mxu0
    %v1622 = vadd.f32 0.0, %v1621
    %1623 = vmatmul.f32.gmra.mxu0 %v1512
    %v1624 = vpop.f32.mrf.mxu0
    %v1625 = vadd.f32 0.0, %v1624
    %1626 = vmatmul.f32.gmra.mxu0 %v1515
    %v1627 = vpop.f32.mrf.mxu0
    %v1628 = vadd.f32 0.0, %v1627
    %1629 = vmatmul.f32.gmra.mxu0 %v1518
    %v1630 = vpop.f32.mrf.mxu0
    %v1631 = vadd.f32 0.0, %v1630
    %1632 = vmatmul.f32.gmra.mxu0 %v1521
    %v1633 = vpop.f32.mrf.mxu0
    %v1634 = vadd.f32 0.0, %v1633
    %1635 = vmatmul.f32.gmra.mxu0 %v1524
    %v1636 = vpop.f32.mrf.mxu0
    %v1637 = vadd.f32 0.0, %v1636
    %1638 = vmatmul.f32.gmra.mxu0 %v1527
    %v1639 = vpop.f32.mrf.mxu0
    %v1640 = vadd.f32 0.0, %v1639
    %1641 = vmatmul.f32.gmra.mxu0 %v1530
    %v1642 = vpop.f32.mrf.mxu0
    %v1643 = vadd.f32 0.0, %v1642
    %1644 = vmatmul.f32.gmra.mxu0 %v1533
    %v1645 = vpop.f32.mrf.mxu0
    %v1646 = vadd.f32 0.0, %v1645
    %1647 = vmatmul.f32.gmra.mxu0 %v1536
    %v1648 = vpop.f32.mrf.mxu0
    %v1649 = vadd.f32 0.0, %v1648
    %1650 = vmatmul.f32.gmra.mxu0 %v1539
    %v1651 = vpop.f32.mrf.mxu0
    %v1652 = vadd.f32 0.0, %v1651
    %1653 = vmatmul.f32.gmra.mxu0 %v1542
    %v1654 = vpop.f32.mrf.mxu0
    %v1655 = vadd.f32 0.0, %v1654
    %1656 = vmatmul.f32.gmra.mxu0 %v1545
    %v1657 = vpop.f32.mrf.mxu0
    %v1658 = vadd.f32 0.0, %v1657
    %1659 = vmatmul.f32.gmra.mxu0 %v1548
    %v1660 = vpop.f32.mrf.mxu0
    %v1661 = vadd.f32 0.0, %v1660
    %1662 = vmatmul.f32.gmra.mxu0 %v1551
    %v1663 = vpop.f32.mrf.mxu0
    %v1664 = vadd.f32 0.0, %v1663
    %1665 = vmatmul.f32.gmra.mxu0 %v1554
    %v1666 = vpop.f32.mrf.mxu0
    %v1667 = vadd.f32 0.0, %v1666
    %1668 = vmatmul.f32.gmra.mxu0 %v1557
    %v1669 = vpop.f32.mrf.mxu0
    %v1670 = vadd.f32 0.0, %v1669
    %1671 = vmatmul.f32.gmra.mxu0 %v1560
    %v1672 = vpop.f32.mrf.mxu0
    %v1673 = vadd.f32 0.0, %v1672
    %1674 = vmatmul.f32.gmra.mxu0 %v1563
    %v1675 = vpop.f32.mrf.mxu0
    %v1676 = vadd.f32 0.0, %v1675
    %1677 = vmatmul.f32.gmra.mxu0 %v1566
    %v1678 = vpop.f32.mrf.mxu0
    %v1679 = vadd.f32 0.0, %v1678
    %1680 = vmatmul.f32.gmra.mxu0 %v1569
    %v1681 = vpop.f32.mrf.mxu0
    %v1682 = vadd.f32 0.0, %v1681
    %1683 = vmatmul.f32.gmra.mxu0 %v1572
    %v1684 = vpop.f32.mrf.mxu0
    %v1685 = vadd.f32 0.0, %v1684
    %1686 = vmatmul.f32.gmra.mxu0 %v1575
    %v1687 = vpop.f32.mrf.mxu0
    %v1688 = vadd.f32 0.0, %v1687
    %1689 = vmatmul.f32.gmra.mxu0 %v1578
    %v1690 = vpop.f32.mrf.mxu0
    %v1691 = vadd.f32 0.0, %v1690
    %1692 = vmatmul.f32.gmra.mxu0 %v1581
    %v1693 = vpop.f32.mrf.mxu0
    %v1694 = vadd.f32 0.0, %v1693
    %1695 = vdwg.mxu0
    %v1696 = vpack.c.bf16 %v1601, %v1601
    %v1697 = vpack.c.bf16 %v1604, %v1604
    %v1698 = vpack.c.bf16 %v1607, %v1607
    %v1699 = vpack.c.bf16 %v1610, %v1610
    %v1700 = vpack.c.bf16 %v1613, %v1613
    %v1701 = vpack.c.bf16 %v1616, %v1616
    %v1702 = vpack.c.bf16 %v1619, %v1619
    %v1703 = vpack.c.bf16 %v1622, %v1622
    %v1704 = vpack.c.bf16 %v1625, %v1625
    %v1705 = vpack.c.bf16 %v1628, %v1628
    %v1706 = vpack.c.bf16 %v1631, %v1631
    %v1707 = vpack.c.bf16 %v1634, %v1634
    %v1708 = vpack.c.bf16 %v1637, %v1637
    %v1709 = vpack.c.bf16 %v1640, %v1640
    %v1710 = vpack.c.bf16 %v1643, %v1643
    %v1711 = vpack.c.bf16 %v1646, %v1646
    %v1712 = vpack.c.bf16 %v1649, %v1649
    %v1713 = vpack.c.bf16 %v1652, %v1652
    %v1714 = vpack.c.bf16 %v1655, %v1655
    %v1715 = vpack.c.bf16 %v1658, %v1658
    %v1716 = vpack.c.bf16 %v1661, %v1661
    %v1717 = vpack.c.bf16 %v1664, %v1664
    %v1718 = vpack.c.bf16 %v1667, %v1667
    %v1719 = vpack.c.bf16 %v1670, %v1670
    %v1720 = vpack.c.bf16 %v1673, %v1673
    %v1721 = vpack.c.bf16 %v1676, %v1676
    %v1722 = vpack.c.bf16 %v1679, %v1679
    %v1723 = vpack.c.bf16 %v1682, %v1682
    %v1724 = vpack.c.bf16 %v1685, %v1685
    %v1725 = vpack.c.bf16 %v1688, %v1688
    %v1726 = vpack.c.bf16 %v1691, %v1691
    %v1727 = vpack.c.bf16 %v1694, %v1694
    %v1728 = vld [vmem:[%s9] sm:$0xf]
    %v1729 = vld [vmem:[%s9 + $0x4] sm:$0xf]
    %v1730 = vld [vmem:[%s9 + $0x8] sm:$0xf]
    %v1731 = vld [vmem:[%s9 + $0xc] sm:$0xf]
    %v1732 = vld [vmem:[%s9 + $0x10] sm:$0xf]
    %v1733 = vld [vmem:[%s9 + $0x14] sm:$0xf]
    %v1734 = vld [vmem:[%s9 + $0x18] sm:$0xf]
    %v1735 = vld [vmem:[%s9 + $0x1c] sm:$0xf]
    %v1736 = vld [vmem:[%s9 + $0x20] sm:$0xf]
    %v1737 = vld [vmem:[%s9 + $0x24] sm:$0xf]
    %v1738 = vld [vmem:[%s9 + $0x28] sm:$0xf]
    %v1739 = vld [vmem:[%s9 + $0x2c] sm:$0xf]
    %v1740 = vld [vmem:[%s9 + $0x30] sm:$0xf]
    %v1741 = vld [vmem:[%s9 + $0x34] sm:$0xf]
    %v1742 = vld [vmem:[%s9 + $0x38] sm:$0xf]
    %v1743 = vld [vmem:[%s9 + $0x3c] sm:$0xf]
    %v1744 = vld [vmem:[%s9 + $0x40] sm:$0xf]
    %v1745 = vld [vmem:[%s9 + $0x44] sm:$0xf]
    %v1746 = vld [vmem:[%s9 + $0x48] sm:$0xf]
    %v1747 = vld [vmem:[%s9 + $0x4c] sm:$0xf]
    %v1748 = vld [vmem:[%s9 + $0x50] sm:$0xf]
    %v1749 = vld [vmem:[%s9 + $0x54] sm:$0xf]
    %v1750 = vld [vmem:[%s9 + $0x58] sm:$0xf]
    %v1751 = vld [vmem:[%s9 + $0x5c] sm:$0xf]
    %v1752 = vld [vmem:[%s9 + $0x60] sm:$0xf]
    %v1753 = vld [vmem:[%s9 + $0x64] sm:$0xf]
    %v1754 = vld [vmem:[%s9 + $0x68] sm:$0xf]
    %v1755 = vld [vmem:[%s9 + $0x6c] sm:$0xf]
    %v1756 = vld [vmem:[%s9 + $0x70] sm:$0xf]
    %v1757 = vld [vmem:[%s9 + $0x74] sm:$0xf]
    %v1758 = vld [vmem:[%s9 + $0x78] sm:$0xf]
    %v1759 = vld [vmem:[%s9 + $0x7c] sm:$0xf]
    %v1760 = vld [vmem:[%s9 + $0x80] sm:$0xf]
    %v1761 = vld [vmem:[%s9 + $0x84] sm:$0xf]
    %v1762 = vld [vmem:[%s9 + $0x88] sm:$0xf]
    %v1763 = vld [vmem:[%s9 + $0x8c] sm:$0xf]
    %v1764 = vld [vmem:[%s9 + $0x90] sm:$0xf]
    %v1765 = vld [vmem:[%s9 + $0x94] sm:$0xf]
    %v1766 = vld [vmem:[%s9 + $0x98] sm:$0xf]
    %v1767 = vld [vmem:[%s9 + $0x9c] sm:$0xf]
    %v1768 = vld [vmem:[%s9 + $0xa0] sm:$0xf]
    %v1769 = vld [vmem:[%s9 + $0xa4] sm:$0xf]
    %v1770 = vld [vmem:[%s9 + $0xa8] sm:$0xf]
    %v1771 = vld [vmem:[%s9 + $0xac] sm:$0xf]
    %v1772 = vld [vmem:[%s9 + $0xb0] sm:$0xf]
    %v1773 = vld [vmem:[%s9 + $0xb4] sm:$0xf]
    %v1774 = vld [vmem:[%s9 + $0xb8] sm:$0xf]
    %v1775 = vld [vmem:[%s9 + $0xbc] sm:$0xf]
    %v1776 = vld [vmem:[%s9 + $0xc0] sm:$0xf]
    %v1777 = vld [vmem:[%s9 + $0xc4] sm:$0xf]
    %v1778 = vld [vmem:[%s9 + $0xc8] sm:$0xf]
    %v1779 = vld [vmem:[%s9 + $0xcc] sm:$0xf]
    %v1780 = vld [vmem:[%s9 + $0xd0] sm:$0xf]
    %v1781 = vld [vmem:[%s9 + $0xd4] sm:$0xf]
    %v1782 = vld [vmem:[%s9 + $0xd8] sm:$0xf]
    %v1783 = vld [vmem:[%s9 + $0xdc] sm:$0xf]
    %v1784 = vld [vmem:[%s9 + $0xe0] sm:$0xf]
    %v1785 = vld [vmem:[%s9 + $0xe4] sm:$0xf]
    %v1786 = vld [vmem:[%s9 + $0xe8] sm:$0xf]
    %v1787 = vld [vmem:[%s9 + $0xec] sm:$0xf]
    %v1788 = vld [vmem:[%s9 + $0xf0] sm:$0xf]
    %v1789 = vld [vmem:[%s9 + $0xf4] sm:$0xf]
    %v1790 = vld [vmem:[%s9 + $0xf8] sm:$0xf]
    %v1791 = vld [vmem:[%s9 + $0xfc] sm:$0xf]
    %v1792 = vld [vmem:[%s9 + $0x100] sm:$0xf]
    %v1793 = vld [vmem:[%s9 + $0x104] sm:$0xf]
    %v1794 = vld [vmem:[%s9 + $0x108] sm:$0xf]
    %v1795 = vld [vmem:[%s9 + $0x10c] sm:$0xf]
    %v1796 = vld [vmem:[%s9 + $0x110] sm:$0xf]
    %v1797 = vld [vmem:[%s9 + $0x114] sm:$0xf]
    %v1798 = vld [vmem:[%s9 + $0x118] sm:$0xf]
    %v1799 = vld [vmem:[%s9 + $0x11c] sm:$0xf]
    %v1800 = vld [vmem:[%s9 + $0x120] sm:$0xf]
    %v1801 = vld [vmem:[%s9 + $0x124] sm:$0xf]
    %v1802 = vld [vmem:[%s9 + $0x128] sm:$0xf]
    %v1803 = vld [vmem:[%s9 + $0x12c] sm:$0xf]
    %v1804 = vld [vmem:[%s9 + $0x130] sm:$0xf]
    %v1805 = vld [vmem:[%s9 + $0x134] sm:$0xf]
    %v1806 = vld [vmem:[%s9 + $0x138] sm:$0xf]
    %v1807 = vld [vmem:[%s9 + $0x13c] sm:$0xf]
    %v1808 = vld [vmem:[%s9 + $0x140] sm:$0xf]
    %v1809 = vld [vmem:[%s9 + $0x144] sm:$0xf]
    %v1810 = vld [vmem:[%s9 + $0x148] sm:$0xf]
    %v1811 = vld [vmem:[%s9 + $0x14c] sm:$0xf]
    %v1812 = vld [vmem:[%s9 + $0x150] sm:$0xf]
    %v1813 = vld [vmem:[%s9 + $0x154] sm:$0xf]
    %v1814 = vld [vmem:[%s9 + $0x158] sm:$0xf]
    %v1815 = vld [vmem:[%s9 + $0x15c] sm:$0xf]
    %v1816 = vld [vmem:[%s9 + $0x160] sm:$0xf]
    %v1817 = vld [vmem:[%s9 + $0x164] sm:$0xf]
    %v1818 = vld [vmem:[%s9 + $0x168] sm:$0xf]
    %v1819 = vld [vmem:[%s9 + $0x16c] sm:$0xf]
    %v1820 = vld [vmem:[%s9 + $0x170] sm:$0xf]
    %v1821 = vld [vmem:[%s9 + $0x174] sm:$0xf]
    %v1822 = vld [vmem:[%s9 + $0x178] sm:$0xf]
    %v1823 = vld [vmem:[%s9 + $0x17c] sm:$0xf]
    %v1824 = vld [vmem:[%s9 + $0x180] sm:$0xf]
    %v1825 = vld [vmem:[%s9 + $0x184] sm:$0xf]
    %v1826 = vld [vmem:[%s9 + $0x188] sm:$0xf]
    %v1827 = vld [vmem:[%s9 + $0x18c] sm:$0xf]
    %v1828 = vld [vmem:[%s9 + $0x190] sm:$0xf]
    %v1829 = vld [vmem:[%s9 + $0x194] sm:$0xf]
    %v1830 = vld [vmem:[%s9 + $0x198] sm:$0xf]
    %v1831 = vld [vmem:[%s9 + $0x19c] sm:$0xf]
    %v1832 = vld [vmem:[%s9 + $0x1a0] sm:$0xf]
    %v1833 = vld [vmem:[%s9 + $0x1a4] sm:$0xf]
    %v1834 = vld [vmem:[%s9 + $0x1a8] sm:$0xf]
    %v1835 = vld [vmem:[%s9 + $0x1ac] sm:$0xf]
    %v1836 = vld [vmem:[%s9 + $0x1b0] sm:$0xf]
    %v1837 = vld [vmem:[%s9 + $0x1b4] sm:$0xf]
    %v1838 = vld [vmem:[%s9 + $0x1b8] sm:$0xf]
    %v1839 = vld [vmem:[%s9 + $0x1bc] sm:$0xf]
    %v1840 = vld [vmem:[%s9 + $0x1c0] sm:$0xf]
    %v1841 = vld [vmem:[%s9 + $0x1c4] sm:$0xf]
    %v1842 = vld [vmem:[%s9 + $0x1c8] sm:$0xf]
    %v1843 = vld [vmem:[%s9 + $0x1cc] sm:$0xf]
    %v1844 = vld [vmem:[%s9 + $0x1d0] sm:$0xf]
    %v1845 = vld [vmem:[%s9 + $0x1d4] sm:$0xf]
    %v1846 = vld [vmem:[%s9 + $0x1d8] sm:$0xf]
    %v1847 = vld [vmem:[%s9 + $0x1dc] sm:$0xf]
    %v1848 = vld [vmem:[%s9 + $0x1e0] sm:$0xf]
    %v1849 = vld [vmem:[%s9 + $0x1e4] sm:$0xf]
    %v1850 = vld [vmem:[%s9 + $0x1e8] sm:$0xf]
    %v1851 = vld [vmem:[%s9 + $0x1ec] sm:$0xf]
    %v1852 = vld [vmem:[%s9 + $0x1f0] sm:$0xf]
    %v1853 = vld [vmem:[%s9 + $0x1f4] sm:$0xf]
    %v1854 = vld [vmem:[%s9 + $0x1f8] sm:$0xf]
    %v1855 = vld [vmem:[%s9 + $0x1fc] sm:$0xf]
    %v1856 = vld [vmem:[%s9 + $0x200] sm:$0xf]
    %v1857 = vld [vmem:[%s9 + $0x204] sm:$0xf]
    %v1858 = vld [vmem:[%s9 + $0x208] sm:$0xf]
    %v1859 = vld [vmem:[%s9 + $0x20c] sm:$0xf]
    %v1860 = vld [vmem:[%s9 + $0x210] sm:$0xf]
    %v1861 = vld [vmem:[%s9 + $0x214] sm:$0xf]
    %v1862 = vld [vmem:[%s9 + $0x218] sm:$0xf]
    %v1863 = vld [vmem:[%s9 + $0x21c] sm:$0xf]
    %v1864 = vld [vmem:[%s9 + $0x220] sm:$0xf]
    %v1865 = vld [vmem:[%s9 + $0x224] sm:$0xf]
    %v1866 = vld [vmem:[%s9 + $0x228] sm:$0xf]
    %v1867 = vld [vmem:[%s9 + $0x22c] sm:$0xf]
    %v1868 = vld [vmem:[%s9 + $0x230] sm:$0xf]
    %v1869 = vld [vmem:[%s9 + $0x234] sm:$0xf]
    %v1870 = vld [vmem:[%s9 + $0x238] sm:$0xf]
    %v1871 = vld [vmem:[%s9 + $0x23c] sm:$0xf]
    %v1872 = vld [vmem:[%s9 + $0x240] sm:$0xf]
    %v1873 = vld [vmem:[%s9 + $0x244] sm:$0xf]
    %v1874 = vld [vmem:[%s9 + $0x248] sm:$0xf]
    %v1875 = vld [vmem:[%s9 + $0x24c] sm:$0xf]
    %v1876 = vld [vmem:[%s9 + $0x250] sm:$0xf]
    %v1877 = vld [vmem:[%s9 + $0x254] sm:$0xf]
    %v1878 = vld [vmem:[%s9 + $0x258] sm:$0xf]
    %v1879 = vld [vmem:[%s9 + $0x25c] sm:$0xf]
    %v1880 = vld [vmem:[%s9 + $0x260] sm:$0xf]
    %v1881 = vld [vmem:[%s9 + $0x264] sm:$0xf]
    %v1882 = vld [vmem:[%s9 + $0x268] sm:$0xf]
    %v1883 = vld [vmem:[%s9 + $0x26c] sm:$0xf]
    %v1884 = vld [vmem:[%s9 + $0x270] sm:$0xf]
    %v1885 = vld [vmem:[%s9 + $0x274] sm:$0xf]
    %v1886 = vld [vmem:[%s9 + $0x278] sm:$0xf]
    %v1887 = vld [vmem:[%s9 + $0x27c] sm:$0xf]
    %v1888 = vld [vmem:[%s9 + $0x280] sm:$0xf]
    %v1889 = vld [vmem:[%s9 + $0x284] sm:$0xf]
    %v1890 = vld [vmem:[%s9 + $0x288] sm:$0xf]
    %v1891 = vld [vmem:[%s9 + $0x28c] sm:$0xf]
    %v1892 = vld [vmem:[%s9 + $0x290] sm:$0xf]
    %v1893 = vld [vmem:[%s9 + $0x294] sm:$0xf]
    %v1894 = vld [vmem:[%s9 + $0x298] sm:$0xf]
    %v1895 = vld [vmem:[%s9 + $0x29c] sm:$0xf]
    %v1896 = vld [vmem:[%s9 + $0x2a0] sm:$0xf]
    %v1897 = vld [vmem:[%s9 + $0x2a4] sm:$0xf]
    %v1898 = vld [vmem:[%s9 + $0x2a8] sm:$0xf]
    %v1899 = vld [vmem:[%s9 + $0x2ac] sm:$0xf]
    %v1900 = vld [vmem:[%s9 + $0x2b0] sm:$0xf]
    %v1901 = vld [vmem:[%s9 + $0x2b4] sm:$0xf]
    %v1902 = vld [vmem:[%s9 + $0x2b8] sm:$0xf]
    %v1903 = vld [vmem:[%s9 + $0x2bc] sm:$0xf]
    %v1904 = vld [vmem:[%s9 + $0x2c0] sm:$0xf]
    %v1905 = vld [vmem:[%s9 + $0x2c4] sm:$0xf]
    %v1906 = vld [vmem:[%s9 + $0x2c8] sm:$0xf]
    %v1907 = vld [vmem:[%s9 + $0x2cc] sm:$0xf]
    %v1908 = vld [vmem:[%s9 + $0x2d0] sm:$0xf]
    %v1909 = vld [vmem:[%s9 + $0x2d4] sm:$0xf]
    %v1910 = vld [vmem:[%s9 + $0x2d8] sm:$0xf]
    %v1911 = vld [vmem:[%s9 + $0x2dc] sm:$0xf]
    %v1912 = vld [vmem:[%s9 + $0x2e0] sm:$0xf]
    %v1913 = vld [vmem:[%s9 + $0x2e4] sm:$0xf]
    %v1914 = vld [vmem:[%s9 + $0x2e8] sm:$0xf]
    %v1915 = vld [vmem:[%s9 + $0x2ec] sm:$0xf]
    %v1916 = vld [vmem:[%s9 + $0x2f0] sm:$0xf]
    %v1917 = vld [vmem:[%s9 + $0x2f4] sm:$0xf]
    %v1918 = vld [vmem:[%s9 + $0x2f8] sm:$0xf]
    %v1919 = vld [vmem:[%s9 + $0x2fc] sm:$0xf]
    %v1920 = vld [vmem:[%s9 + $0x300] sm:$0xf]
    %v1921 = vld [vmem:[%s9 + $0x304] sm:$0xf]
    %v1922 = vld [vmem:[%s9 + $0x308] sm:$0xf]
    %v1923 = vld [vmem:[%s9 + $0x30c] sm:$0xf]
    %v1924 = vld [vmem:[%s9 + $0x310] sm:$0xf]
    %v1925 = vld [vmem:[%s9 + $0x314] sm:$0xf]
    %v1926 = vld [vmem:[%s9 + $0x318] sm:$0xf]
    %v1927 = vld [vmem:[%s9 + $0x31c] sm:$0xf]
    %v1928 = vld [vmem:[%s9 + $0x320] sm:$0xf]
    %v1929 = vld [vmem:[%s9 + $0x324] sm:$0xf]
    %v1930 = vld [vmem:[%s9 + $0x328] sm:$0xf]
    %v1931 = vld [vmem:[%s9 + $0x32c] sm:$0xf]
    %v1932 = vld [vmem:[%s9 + $0x330] sm:$0xf]
    %v1933 = vld [vmem:[%s9 + $0x334] sm:$0xf]
    %v1934 = vld [vmem:[%s9 + $0x338] sm:$0xf]
    %v1935 = vld [vmem:[%s9 + $0x33c] sm:$0xf]
    %v1936 = vld [vmem:[%s9 + $0x340] sm:$0xf]
    %v1937 = vld [vmem:[%s9 + $0x344] sm:$0xf]
    %v1938 = vld [vmem:[%s9 + $0x348] sm:$0xf]
    %v1939 = vld [vmem:[%s9 + $0x34c] sm:$0xf]
    %v1940 = vld [vmem:[%s9 + $0x350] sm:$0xf]
    %v1941 = vld [vmem:[%s9 + $0x354] sm:$0xf]
    %v1942 = vld [vmem:[%s9 + $0x358] sm:$0xf]
    %v1943 = vld [vmem:[%s9 + $0x35c] sm:$0xf]
    %v1944 = vld [vmem:[%s9 + $0x360] sm:$0xf]
    %v1945 = vld [vmem:[%s9 + $0x364] sm:$0xf]
    %v1946 = vld [vmem:[%s9 + $0x368] sm:$0xf]
    %v1947 = vld [vmem:[%s9 + $0x36c] sm:$0xf]
    %v1948 = vld [vmem:[%s9 + $0x370] sm:$0xf]
    %v1949 = vld [vmem:[%s9 + $0x374] sm:$0xf]
    %v1950 = vld [vmem:[%s9 + $0x378] sm:$0xf]
    %v1951 = vld [vmem:[%s9 + $0x37c] sm:$0xf]
    %v1952 = vld [vmem:[%s9 + $0x380] sm:$0xf]
    %v1953 = vld [vmem:[%s9 + $0x384] sm:$0xf]
    %v1954 = vld [vmem:[%s9 + $0x388] sm:$0xf]
    %v1955 = vld [vmem:[%s9 + $0x38c] sm:$0xf]
    %v1956 = vld [vmem:[%s9 + $0x390] sm:$0xf]
    %v1957 = vld [vmem:[%s9 + $0x394] sm:$0xf]
    %v1958 = vld [vmem:[%s9 + $0x398] sm:$0xf]
    %v1959 = vld [vmem:[%s9 + $0x39c] sm:$0xf]
    %v1960 = vld [vmem:[%s9 + $0x3a0] sm:$0xf]
    %v1961 = vld [vmem:[%s9 + $0x3a4] sm:$0xf]
    %v1962 = vld [vmem:[%s9 + $0x3a8] sm:$0xf]
    %v1963 = vld [vmem:[%s9 + $0x3ac] sm:$0xf]
    %v1964 = vld [vmem:[%s9 + $0x3b0] sm:$0xf]
    %v1965 = vld [vmem:[%s9 + $0x3b4] sm:$0xf]
    %v1966 = vld [vmem:[%s9 + $0x3b8] sm:$0xf]
    %v1967 = vld [vmem:[%s9 + $0x3bc] sm:$0xf]
    %v1968 = vld [vmem:[%s9 + $0x3c0] sm:$0xf]
    %v1969 = vld [vmem:[%s9 + $0x3c4] sm:$0xf]
    %v1970 = vld [vmem:[%s9 + $0x3c8] sm:$0xf]
    %v1971 = vld [vmem:[%s9 + $0x3cc] sm:$0xf]
    %v1972 = vld [vmem:[%s9 + $0x3d0] sm:$0xf]
    %v1973 = vld [vmem:[%s9 + $0x3d4] sm:$0xf]
    %v1974 = vld [vmem:[%s9 + $0x3d8] sm:$0xf]
    %v1975 = vld [vmem:[%s9 + $0x3dc] sm:$0xf]
    %v1976 = vld [vmem:[%s9 + $0x3e0] sm:$0xf]
    %v1977 = vld [vmem:[%s9 + $0x3e4] sm:$0xf]
    %v1978 = vld [vmem:[%s9 + $0x3e8] sm:$0xf]
    %v1979 = vld [vmem:[%s9 + $0x3ec] sm:$0xf]
    %v1980 = vld [vmem:[%s9 + $0x3f0] sm:$0xf]
    %v1981 = vld [vmem:[%s9 + $0x3f4] sm:$0xf]
    %v1982 = vld [vmem:[%s9 + $0x3f8] sm:$0xf]
    %v1983 = vld [vmem:[%s9 + $0x3fc] sm:$0xf]
    %v1986 = vunpack.c.l.b16 %v1696
    %v1987 = vunpack.c.l.b16 %v1697
    %v1988 = vpack.c.b16 %v1987, %v1986
    %v2006 = vunpack.c.l.b16 %v1728
    %v2007 = vunpack.c.l.b16 %v1729
    %v2008 = vunpack.c.l.b16 %v1730
    %v2009 = vunpack.c.l.b16 %v1731
    %v2010 = vunpack.c.l.b16 %v1732
    %v2011 = vunpack.c.l.b16 %v1733
    %v2012 = vunpack.c.l.b16 %v1734
    %v2013 = vunpack.c.l.b16 %v1735
    %v2014 = vunpack.c.l.b16 %v1736
    %v2015 = vunpack.c.l.b16 %v1737
    %v2016 = vunpack.c.l.b16 %v1738
    %v2017 = vunpack.c.l.b16 %v1739
    %v2018 = vunpack.c.l.b16 %v1740
    %v2019 = vunpack.c.l.b16 %v1741
    %v2020 = vunpack.c.l.b16 %v1742
    %v2021 = vunpack.c.l.b16 %v1743
    %v2022 = vpack.c.b16 %v2007, %v2006
    %v2023 = vpack.c.b16 %v2009, %v2008
    %v2024 = vpack.c.b16 %v2011, %v2010
    %v2025 = vpack.c.b16 %v2013, %v2012
    %v2026 = vpack.c.b16 %v2015, %v2014
    %v2027 = vpack.c.b16 %v2017, %v2016
    %v2028 = vpack.c.b16 %v2019, %v2018
    %v2029 = vpack.c.b16 %v2021, %v2020
    %2038 = vmatpush.bf16.msra.mxu0 %v2029
    %2039 = vmatpush.bf16.msra.mxu0 %v2028
    %2040 = vmatpush.bf16.msra.mxu0 %v2027
    %2041 = vmatpush.bf16.msra.mxu0 %v2026
    %2042 = vmatpush.bf16.msra.mxu0 %v2025
    %2043 = vmatpush.bf16.msra.mxu0 %v2024
    %2044 = vmatpush.bf16.msra.mxu0 %v2023
    %2045 = vmatpush.bf16.msra.mxu0 %v2022
    %2046 = vmatmul.bf16.gmra.mxu0 %v1988
    %v2047 = vpop.f32.mrf.mxu0
    %v2048 = vadd.f32 0.0, %v2047
    %v2049 = vpop.f32.mrf.mxu0
    %v2050 = vadd.f32 0.0, %v2049
    %2051 = vdwg.mxu0
    %v2054 = vunpack.c.l.b16 %v1698
    %v2055 = vunpack.c.l.b16 %v1699
    %v2056 = vpack.c.b16 %v2055, %v2054
    %v2074 = vunpack.c.l.b16 %v1744
    %v2075 = vunpack.c.l.b16 %v1745
    %v2076 = vunpack.c.l.b16 %v1746
    %v2077 = vunpack.c.l.b16 %v1747
    %v2078 = vunpack.c.l.b16 %v1748
    %v2079 = vunpack.c.l.b16 %v1749
    %v2080 = vunpack.c.l.b16 %v1750
    %v2081 = vunpack.c.l.b16 %v1751
    %v2082 = vunpack.c.l.b16 %v1752
    %v2083 = vunpack.c.l.b16 %v1753
    %v2084 = vunpack.c.l.b16 %v1754
    %v2085 = vunpack.c.l.b16 %v1755
    %v2086 = vunpack.c.l.b16 %v1756
    %v2087 = vunpack.c.l.b16 %v1757
    %v2088 = vunpack.c.l.b16 %v1758
    %v2089 = vunpack.c.l.b16 %v1759
    %v2090 = vpack.c.b16 %v2075, %v2074
    %v2091 = vpack.c.b16 %v2077, %v2076
    %v2092 = vpack.c.b16 %v2079, %v2078
    %v2093 = vpack.c.b16 %v2081, %v2080
    %v2094 = vpack.c.b16 %v2083, %v2082
    %v2095 = vpack.c.b16 %v2085, %v2084
    %v2096 = vpack.c.b16 %v2087, %v2086
    %v2097 = vpack.c.b16 %v2089, %v2088
    %2106 = vmatpush.bf16.msra.mxu0 %v2097
    %2107 = vmatpush.bf16.msra.mxu0 %v2096
    %2108 = vmatpush.bf16.msra.mxu0 %v2095
    %2109 = vmatpush.bf16.msra.mxu0 %v2094
    %2110 = vmatpush.bf16.msra.mxu0 %v2093
    %2111 = vmatpush.bf16.msra.mxu0 %v2092
    %2112 = vmatpush.bf16.msra.mxu0 %v2091
    %2113 = vmatpush.bf16.msra.mxu0 %v2090
    %2114 = vmatmul.bf16.gmra.mxu0 %v2056
    %v2115 = vpop.f32.mrf.mxu0
    %v2116 = vadd.f32 0.0, %v2115
    %v2117 = vpop.f32.mrf.mxu0
    %v2118 = vadd.f32 0.0, %v2117
    %2119 = vdwg.mxu0
    %v2122 = vunpack.c.l.b16 %v1700
    %v2123 = vunpack.c.l.b16 %v1701
    %v2124 = vpack.c.b16 %v2123, %v2122
    %v2142 = vunpack.c.l.b16 %v1760
    %v2143 = vunpack.c.l.b16 %v1761
    %v2144 = vunpack.c.l.b16 %v1762
    %v2145 = vunpack.c.l.b16 %v1763
    %v2146 = vunpack.c.l.b16 %v1764
    %v2147 = vunpack.c.l.b16 %v1765
    %v2148 = vunpack.c.l.b16 %v1766
    %v2149 = vunpack.c.l.b16 %v1767
    %v2150 = vunpack.c.l.b16 %v1768
    %v2151 = vunpack.c.l.b16 %v1769
    %v2152 = vunpack.c.l.b16 %v1770
    %v2153 = vunpack.c.l.b16 %v1771
    %v2154 = vunpack.c.l.b16 %v1772
    %v2155 = vunpack.c.l.b16 %v1773
    %v2156 = vunpack.c.l.b16 %v1774
    %v2157 = vunpack.c.l.b16 %v1775
    %v2158 = vpack.c.b16 %v2143, %v2142
    %v2159 = vpack.c.b16 %v2145, %v2144
    %v2160 = vpack.c.b16 %v2147, %v2146
    %v2161 = vpack.c.b16 %v2149, %v2148
    %v2162 = vpack.c.b16 %v2151, %v2150
    %v2163 = vpack.c.b16 %v2153, %v2152
    %v2164 = vpack.c.b16 %v2155, %v2154
    %v2165 = vpack.c.b16 %v2157, %v2156
    %2174 = vmatpush.bf16.msra.mxu0 %v2165
    %2175 = vmatpush.bf16.msra.mxu0 %v2164
    %2176 = vmatpush.bf16.msra.mxu0 %v2163
    %2177 = vmatpush.bf16.msra.mxu0 %v2162
    %2178 = vmatpush.bf16.msra.mxu0 %v2161
    %2179 = vmatpush.bf16.msra.mxu0 %v2160
    %2180 = vmatpush.bf16.msra.mxu0 %v2159
    %2181 = vmatpush.bf16.msra.mxu0 %v2158
    %2182 = vmatmul.bf16.gmra.mxu0 %v2124
    %v2183 = vpop.f32.mrf.mxu0
    %v2184 = vadd.f32 0.0, %v2183
    %v2185 = vpop.f32.mrf.mxu0
    %v2186 = vadd.f32 0.0, %v2185
    %2187 = vdwg.mxu0
    %v2190 = vunpack.c.l.b16 %v1702
    %v2191 = vunpack.c.l.b16 %v1703
    %v2192 = vpack.c.b16 %v2191, %v2190
    %v2210 = vunpack.c.l.b16 %v1776
    %v2211 = vunpack.c.l.b16 %v1777
    %v2212 = vunpack.c.l.b16 %v1778
    %v2213 = vunpack.c.l.b16 %v1779
    %v2214 = vunpack.c.l.b16 %v1780
    %v2215 = vunpack.c.l.b16 %v1781
    %v2216 = vunpack.c.l.b16 %v1782
    %v2217 = vunpack.c.l.b16 %v1783
    %v2218 = vunpack.c.l.b16 %v1784
    %v2219 = vunpack.c.l.b16 %v1785
    %v2220 = vunpack.c.l.b16 %v1786
    %v2221 = vunpack.c.l.b16 %v1787
    %v2222 = vunpack.c.l.b16 %v1788
    %v2223 = vunpack.c.l.b16 %v1789
    %v2224 = vunpack.c.l.b16 %v1790
    %v2225 = vunpack.c.l.b16 %v1791
    %v2226 = vpack.c.b16 %v2211, %v2210
    %v2227 = vpack.c.b16 %v2213, %v2212
    %v2228 = vpack.c.b16 %v2215, %v2214
    %v2229 = vpack.c.b16 %v2217, %v2216
    %v2230 = vpack.c.b16 %v2219, %v2218
    %v2231 = vpack.c.b16 %v2221, %v2220
    %v2232 = vpack.c.b16 %v2223, %v2222
    %v2233 = vpack.c.b16 %v2225, %v2224
    %2242 = vmatpush.bf16.msra.mxu0 %v2233
    %2243 = vmatpush.bf16.msra.mxu0 %v2232
    %2244 = vmatpush.bf16.msra.mxu0 %v2231
    %2245 = vmatpush.bf16.msra.mxu0 %v2230
    %2246 = vmatpush.bf16.msra.mxu0 %v2229
    %2247 = vmatpush.bf16.msra.mxu0 %v2228
    %2248 = vmatpush.bf16.msra.mxu0 %v2227
    %2249 = vmatpush.bf16.msra.mxu0 %v2226
    %2250 = vmatmul.bf16.gmra.mxu0 %v2192
    %v2251 = vpop.f32.mrf.mxu0
    %v2252 = vadd.f32 0.0, %v2251
    %v2253 = vpop.f32.mrf.mxu0
    %v2254 = vadd.f32 0.0, %v2253
    %2255 = vdwg.mxu0
    %v2258 = vunpack.c.l.b16 %v1704
    %v2259 = vunpack.c.l.b16 %v1705
    %v2260 = vpack.c.b16 %v2259, %v2258
    %v2278 = vunpack.c.l.b16 %v1792
    %v2279 = vunpack.c.l.b16 %v1793
    %v2280 = vunpack.c.l.b16 %v1794
    %v2281 = vunpack.c.l.b16 %v1795
    %v2282 = vunpack.c.l.b16 %v1796
    %v2283 = vunpack.c.l.b16 %v1797
    %v2284 = vunpack.c.l.b16 %v1798
    %v2285 = vunpack.c.l.b16 %v1799
    %v2286 = vunpack.c.l.b16 %v1800
    %v2287 = vunpack.c.l.b16 %v1801
    %v2288 = vunpack.c.l.b16 %v1802
    %v2289 = vunpack.c.l.b16 %v1803
    %v2290 = vunpack.c.l.b16 %v1804
    %v2291 = vunpack.c.l.b16 %v1805
    %v2292 = vunpack.c.l.b16 %v1806
    %v2293 = vunpack.c.l.b16 %v1807
    %v2294 = vpack.c.b16 %v2279, %v2278
    %v2295 = vpack.c.b16 %v2281, %v2280
    %v2296 = vpack.c.b16 %v2283, %v2282
    %v2297 = vpack.c.b16 %v2285, %v2284
    %v2298 = vpack.c.b16 %v2287, %v2286
    %v2299 = vpack.c.b16 %v2289, %v2288
    %v2300 = vpack.c.b16 %v2291, %v2290
    %v2301 = vpack.c.b16 %v2293, %v2292
    %2310 = vmatpush.bf16.msra.mxu0 %v2301
    %2311 = vmatpush.bf16.msra.mxu0 %v2300
    %2312 = vmatpush.bf16.msra.mxu0 %v2299
    %2313 = vmatpush.bf16.msra.mxu0 %v2298
    %2314 = vmatpush.bf16.msra.mxu0 %v2297
    %2315 = vmatpush.bf16.msra.mxu0 %v2296
    %2316 = vmatpush.bf16.msra.mxu0 %v2295
    %2317 = vmatpush.bf16.msra.mxu0 %v2294
    %2318 = vmatmul.bf16.gmra.mxu0 %v2260
    %v2319 = vpop.f32.mrf.mxu0
    %v2320 = vadd.f32 0.0, %v2319
    %v2321 = vpop.f32.mrf.mxu0
    %v2322 = vadd.f32 0.0, %v2321
    %2323 = vdwg.mxu0
    %v2326 = vunpack.c.l.b16 %v1706
    %v2327 = vunpack.c.l.b16 %v1707
    %v2328 = vpack.c.b16 %v2327, %v2326
    %v2346 = vunpack.c.l.b16 %v1808
    %v2347 = vunpack.c.l.b16 %v1809
    %v2348 = vunpack.c.l.b16 %v1810
    %v2349 = vunpack.c.l.b16 %v1811
    %v2350 = vunpack.c.l.b16 %v1812
    %v2351 = vunpack.c.l.b16 %v1813
    %v2352 = vunpack.c.l.b16 %v1814
    %v2353 = vunpack.c.l.b16 %v1815
    %v2354 = vunpack.c.l.b16 %v1816
    %v2355 = vunpack.c.l.b16 %v1817
    %v2356 = vunpack.c.l.b16 %v1818
    %v2357 = vunpack.c.l.b16 %v1819
    %v2358 = vunpack.c.l.b16 %v1820
    %v2359 = vunpack.c.l.b16 %v1821
    %v2360 = vunpack.c.l.b16 %v1822
    %v2361 = vunpack.c.l.b16 %v1823
    %v2362 = vpack.c.b16 %v2347, %v2346
    %v2363 = vpack.c.b16 %v2349, %v2348
    %v2364 = vpack.c.b16 %v2351, %v2350
    %v2365 = vpack.c.b16 %v2353, %v2352
    %v2366 = vpack.c.b16 %v2355, %v2354
    %v2367 = vpack.c.b16 %v2357, %v2356
    %v2368 = vpack.c.b16 %v2359, %v2358
    %v2369 = vpack.c.b16 %v2361, %v2360
    %2378 = vmatpush.bf16.msra.mxu0 %v2369
    %2379 = vmatpush.bf16.msra.mxu0 %v2368
    %2380 = vmatpush.bf16.msra.mxu0 %v2367
    %2381 = vmatpush.bf16.msra.mxu0 %v2366
    %2382 = vmatpush.bf16.msra.mxu0 %v2365
    %2383 = vmatpush.bf16.msra.mxu0 %v2364
    %2384 = vmatpush.bf16.msra.mxu0 %v2363
    %2385 = vmatpush.bf16.msra.mxu0 %v2362
    %2386 = vmatmul.bf16.gmra.mxu0 %v2328
    %v2387 = vpop.f32.mrf.mxu0
    %v2388 = vadd.f32 0.0, %v2387
    %v2389 = vpop.f32.mrf.mxu0
    %v2390 = vadd.f32 0.0, %v2389
    %2391 = vdwg.mxu0
    %v2394 = vunpack.c.l.b16 %v1708
    %v2395 = vunpack.c.l.b16 %v1709
    %v2396 = vpack.c.b16 %v2395, %v2394
    %v2414 = vunpack.c.l.b16 %v1824
    %v2415 = vunpack.c.l.b16 %v1825
    %v2416 = vunpack.c.l.b16 %v1826
    %v2417 = vunpack.c.l.b16 %v1827
    %v2418 = vunpack.c.l.b16 %v1828
    %v2419 = vunpack.c.l.b16 %v1829
    %v2420 = vunpack.c.l.b16 %v1830
    %v2421 = vunpack.c.l.b16 %v1831
    %v2422 = vunpack.c.l.b16 %v1832
    %v2423 = vunpack.c.l.b16 %v1833
    %v2424 = vunpack.c.l.b16 %v1834
    %v2425 = vunpack.c.l.b16 %v1835
    %v2426 = vunpack.c.l.b16 %v1836
    %v2427 = vunpack.c.l.b16 %v1837
    %v2428 = vunpack.c.l.b16 %v1838
    %v2429 = vunpack.c.l.b16 %v1839
    %v2430 = vpack.c.b16 %v2415, %v2414
    %v2431 = vpack.c.b16 %v2417, %v2416
    %v2432 = vpack.c.b16 %v2419, %v2418
    %v2433 = vpack.c.b16 %v2421, %v2420
    %v2434 = vpack.c.b16 %v2423, %v2422
    %v2435 = vpack.c.b16 %v2425, %v2424
    %v2436 = vpack.c.b16 %v2427, %v2426
    %v2437 = vpack.c.b16 %v2429, %v2428
    %2446 = vmatpush.bf16.msra.mxu0 %v2437
    %2447 = vmatpush.bf16.msra.mxu0 %v2436
    %2448 = vmatpush.bf16.msra.mxu0 %v2435
    %2449 = vmatpush.bf16.msra.mxu0 %v2434
    %2450 = vmatpush.bf16.msra.mxu0 %v2433
    %2451 = vmatpush.bf16.msra.mxu0 %v2432
    %2452 = vmatpush.bf16.msra.mxu0 %v2431
    %2453 = vmatpush.bf16.msra.mxu0 %v2430
    %2454 = vmatmul.bf16.gmra.mxu0 %v2396
    %v2455 = vpop.f32.mrf.mxu0
    %v2456 = vadd.f32 0.0, %v2455
    %v2457 = vpop.f32.mrf.mxu0
    %v2458 = vadd.f32 0.0, %v2457
    %2459 = vdwg.mxu0
    %v2462 = vunpack.c.l.b16 %v1710
    %v2463 = vunpack.c.l.b16 %v1711
    %v2464 = vpack.c.b16 %v2463, %v2462
    %v2482 = vunpack.c.l.b16 %v1840
    %v2483 = vunpack.c.l.b16 %v1841
    %v2484 = vunpack.c.l.b16 %v1842
    %v2485 = vunpack.c.l.b16 %v1843
    %v2486 = vunpack.c.l.b16 %v1844
    %v2487 = vunpack.c.l.b16 %v1845
    %v2488 = vunpack.c.l.b16 %v1846
    %v2489 = vunpack.c.l.b16 %v1847
    %v2490 = vunpack.c.l.b16 %v1848
    %v2491 = vunpack.c.l.b16 %v1849
    %v2492 = vunpack.c.l.b16 %v1850
    %v2493 = vunpack.c.l.b16 %v1851
    %v2494 = vunpack.c.l.b16 %v1852
    %v2495 = vunpack.c.l.b16 %v1853
    %v2496 = vunpack.c.l.b16 %v1854
    %v2497 = vunpack.c.l.b16 %v1855
    %v2498 = vpack.c.b16 %v2483, %v2482
    %v2499 = vpack.c.b16 %v2485, %v2484
    %v2500 = vpack.c.b16 %v2487, %v2486
    %v2501 = vpack.c.b16 %v2489, %v2488
    %v2502 = vpack.c.b16 %v2491, %v2490
    %v2503 = vpack.c.b16 %v2493, %v2492
    %v2504 = vpack.c.b16 %v2495, %v2494
    %v2505 = vpack.c.b16 %v2497, %v2496
    %2514 = vmatpush.bf16.msra.mxu0 %v2505
    %2515 = vmatpush.bf16.msra.mxu0 %v2504
    %2516 = vmatpush.bf16.msra.mxu0 %v2503
    %2517 = vmatpush.bf16.msra.mxu0 %v2502
    %2518 = vmatpush.bf16.msra.mxu0 %v2501
    %2519 = vmatpush.bf16.msra.mxu0 %v2500
    %2520 = vmatpush.bf16.msra.mxu0 %v2499
    %2521 = vmatpush.bf16.msra.mxu0 %v2498
    %2522 = vmatmul.bf16.gmra.mxu0 %v2464
    %v2523 = vpop.f32.mrf.mxu0
    %v2524 = vadd.f32 0.0, %v2523
    %v2525 = vpop.f32.mrf.mxu0
    %v2526 = vadd.f32 0.0, %v2525
    %2527 = vdwg.mxu0
    %v2530 = vunpack.c.l.b16 %v1712
    %v2531 = vunpack.c.l.b16 %v1713
    %v2532 = vpack.c.b16 %v2531, %v2530
    %v2550 = vunpack.c.l.b16 %v1856
    %v2551 = vunpack.c.l.b16 %v1857
    %v2552 = vunpack.c.l.b16 %v1858
    %v2553 = vunpack.c.l.b16 %v1859
    %v2554 = vunpack.c.l.b16 %v1860
    %v2555 = vunpack.c.l.b16 %v1861
    %v2556 = vunpack.c.l.b16 %v1862
    %v2557 = vunpack.c.l.b16 %v1863
    %v2558 = vunpack.c.l.b16 %v1864
    %v2559 = vunpack.c.l.b16 %v1865
    %v2560 = vunpack.c.l.b16 %v1866
    %v2561 = vunpack.c.l.b16 %v1867
    %v2562 = vunpack.c.l.b16 %v1868
    %v2563 = vunpack.c.l.b16 %v1869
    %v2564 = vunpack.c.l.b16 %v1870
    %v2565 = vunpack.c.l.b16 %v1871
    %v2566 = vpack.c.b16 %v2551, %v2550
    %v2567 = vpack.c.b16 %v2553, %v2552
    %v2568 = vpack.c.b16 %v2555, %v2554
    %v2569 = vpack.c.b16 %v2557, %v2556
    %v2570 = vpack.c.b16 %v2559, %v2558
    %v2571 = vpack.c.b16 %v2561, %v2560
    %v2572 = vpack.c.b16 %v2563, %v2562
    %v2573 = vpack.c.b16 %v2565, %v2564
    %2582 = vmatpush.bf16.msra.mxu0 %v2573
    %2583 = vmatpush.bf16.msra.mxu0 %v2572
    %2584 = vmatpush.bf16.msra.mxu0 %v2571
    %2585 = vmatpush.bf16.msra.mxu0 %v2570
    %2586 = vmatpush.bf16.msra.mxu0 %v2569
    %2587 = vmatpush.bf16.msra.mxu0 %v2568
    %2588 = vmatpush.bf16.msra.mxu0 %v2567
    %2589 = vmatpush.bf16.msra.mxu0 %v2566
    %2590 = vmatmul.bf16.gmra.mxu0 %v2532
    %v2591 = vpop.f32.mrf.mxu0
    %v2592 = vadd.f32 0.0, %v2591
    %v2593 = vpop.f32.mrf.mxu0
    %v2594 = vadd.f32 0.0, %v2593
    %2595 = vdwg.mxu0
    %v2598 = vunpack.c.l.b16 %v1714
    %v2599 = vunpack.c.l.b16 %v1715
    %v2600 = vpack.c.b16 %v2599, %v2598
    %v2618 = vunpack.c.l.b16 %v1872
    %v2619 = vunpack.c.l.b16 %v1873
    %v2620 = vunpack.c.l.b16 %v1874
    %v2621 = vunpack.c.l.b16 %v1875
    %v2622 = vunpack.c.l.b16 %v1876
    %v2623 = vunpack.c.l.b16 %v1877
    %v2624 = vunpack.c.l.b16 %v1878
    %v2625 = vunpack.c.l.b16 %v1879
    %v2626 = vunpack.c.l.b16 %v1880
    %v2627 = vunpack.c.l.b16 %v1881
    %v2628 = vunpack.c.l.b16 %v1882
    %v2629 = vunpack.c.l.b16 %v1883
    %v2630 = vunpack.c.l.b16 %v1884
    %v2631 = vunpack.c.l.b16 %v1885
    %v2632 = vunpack.c.l.b16 %v1886
    %v2633 = vunpack.c.l.b16 %v1887
    %v2634 = vpack.c.b16 %v2619, %v2618
    %v2635 = vpack.c.b16 %v2621, %v2620
    %v2636 = vpack.c.b16 %v2623, %v2622
    %v2637 = vpack.c.b16 %v2625, %v2624
    %v2638 = vpack.c.b16 %v2627, %v2626
    %v2639 = vpack.c.b16 %v2629, %v2628
    %v2640 = vpack.c.b16 %v2631, %v2630
    %v2641 = vpack.c.b16 %v2633, %v2632
    %2650 = vmatpush.bf16.msra.mxu0 %v2641
    %2651 = vmatpush.bf16.msra.mxu0 %v2640
    %2652 = vmatpush.bf16.msra.mxu0 %v2639
    %2653 = vmatpush.bf16.msra.mxu0 %v2638
    %2654 = vmatpush.bf16.msra.mxu0 %v2637
    %2655 = vmatpush.bf16.msra.mxu0 %v2636
    %2656 = vmatpush.bf16.msra.mxu0 %v2635
    %2657 = vmatpush.bf16.msra.mxu0 %v2634
    %2658 = vmatmul.bf16.gmra.mxu0 %v2600
    %v2659 = vpop.f32.mrf.mxu0
    %v2660 = vadd.f32 0.0, %v2659
    %v2661 = vpop.f32.mrf.mxu0
    %v2662 = vadd.f32 0.0, %v2661
    %2663 = vdwg.mxu0
    %v2666 = vunpack.c.l.b16 %v1716
    %v2667 = vunpack.c.l.b16 %v1717
    %v2668 = vpack.c.b16 %v2667, %v2666
    %v2686 = vunpack.c.l.b16 %v1888
    %v2687 = vunpack.c.l.b16 %v1889
    %v2688 = vunpack.c.l.b16 %v1890
    %v2689 = vunpack.c.l.b16 %v1891
    %v2690 = vunpack.c.l.b16 %v1892
    %v2691 = vunpack.c.l.b16 %v1893
    %v2692 = vunpack.c.l.b16 %v1894
    %v2693 = vunpack.c.l.b16 %v1895
    %v2694 = vunpack.c.l.b16 %v1896
    %v2695 = vunpack.c.l.b16 %v1897
    %v2696 = vunpack.c.l.b16 %v1898
    %v2697 = vunpack.c.l.b16 %v1899
    %v2698 = vunpack.c.l.b16 %v1900
    %v2699 = vunpack.c.l.b16 %v1901
    %v2700 = vunpack.c.l.b16 %v1902
    %v2701 = vunpack.c.l.b16 %v1903
    %v2702 = vpack.c.b16 %v2687, %v2686
    %v2703 = vpack.c.b16 %v2689, %v2688
    %v2704 = vpack.c.b16 %v2691, %v2690
    %v2705 = vpack.c.b16 %v2693, %v2692
    %v2706 = vpack.c.b16 %v2695, %v2694
    %v2707 = vpack.c.b16 %v2697, %v2696
    %v2708 = vpack.c.b16 %v2699, %v2698
    %v2709 = vpack.c.b16 %v2701, %v2700
    %2718 = vmatpush.bf16.msra.mxu0 %v2709
    %2719 = vmatpush.bf16.msra.mxu0 %v2708
    %2720 = vmatpush.bf16.msra.mxu0 %v2707
    %2721 = vmatpush.bf16.msra.mxu0 %v2706
    %2722 = vmatpush.bf16.msra.mxu0 %v2705
    %2723 = vmatpush.bf16.msra.mxu0 %v2704
    %2724 = vmatpush.bf16.msra.mxu0 %v2703
    %2725 = vmatpush.bf16.msra.mxu0 %v2702
    %2726 = vmatmul.bf16.gmra.mxu0 %v2668
    %v2727 = vpop.f32.mrf.mxu0
    %v2728 = vadd.f32 0.0, %v2727
    %v2729 = vpop.f32.mrf.mxu0
    %v2730 = vadd.f32 0.0, %v2729
    %2731 = vdwg.mxu0
    %v2734 = vunpack.c.l.b16 %v1718
    %v2735 = vunpack.c.l.b16 %v1719
    %v2736 = vpack.c.b16 %v2735, %v2734
    %v2754 = vunpack.c.l.b16 %v1904
    %v2755 = vunpack.c.l.b16 %v1905
    %v2756 = vunpack.c.l.b16 %v1906
    %v2757 = vunpack.c.l.b16 %v1907
    %v2758 = vunpack.c.l.b16 %v1908
    %v2759 = vunpack.c.l.b16 %v1909
    %v2760 = vunpack.c.l.b16 %v1910
    %v2761 = vunpack.c.l.b16 %v1911
    %v2762 = vunpack.c.l.b16 %v1912
    %v2763 = vunpack.c.l.b16 %v1913
    %v2764 = vunpack.c.l.b16 %v1914
    %v2765 = vunpack.c.l.b16 %v1915
    %v2766 = vunpack.c.l.b16 %v1916
    %v2767 = vunpack.c.l.b16 %v1917
    %v2768 = vunpack.c.l.b16 %v1918
    %v2769 = vunpack.c.l.b16 %v1919
    %v2770 = vpack.c.b16 %v2755, %v2754
    %v2771 = vpack.c.b16 %v2757, %v2756
    %v2772 = vpack.c.b16 %v2759, %v2758
    %v2773 = vpack.c.b16 %v2761, %v2760
    %v2774 = vpack.c.b16 %v2763, %v2762
    %v2775 = vpack.c.b16 %v2765, %v2764
    %v2776 = vpack.c.b16 %v2767, %v2766
    %v2777 = vpack.c.b16 %v2769, %v2768
    %2786 = vmatpush.bf16.msra.mxu0 %v2777
    %2787 = vmatpush.bf16.msra.mxu0 %v2776
    %2788 = vmatpush.bf16.msra.mxu0 %v2775
    %2789 = vmatpush.bf16.msra.mxu0 %v2774
    %2790 = vmatpush.bf16.msra.mxu0 %v2773
    %2791 = vmatpush.bf16.msra.mxu0 %v2772
    %2792 = vmatpush.bf16.msra.mxu0 %v2771
    %2793 = vmatpush.bf16.msra.mxu0 %v2770
    %2794 = vmatmul.bf16.gmra.mxu0 %v2736
    %v2795 = vpop.f32.mrf.mxu0
    %v2796 = vadd.f32 0.0, %v2795
    %v2797 = vpop.f32.mrf.mxu0
    %v2798 = vadd.f32 0.0, %v2797
    %2799 = vdwg.mxu0
    %v2802 = vunpack.c.l.b16 %v1720
    %v2803 = vunpack.c.l.b16 %v1721
    %v2804 = vpack.c.b16 %v2803, %v2802
    %v2822 = vunpack.c.l.b16 %v1920
    %v2823 = vunpack.c.l.b16 %v1921
    %v2824 = vunpack.c.l.b16 %v1922
    %v2825 = vunpack.c.l.b16 %v1923
    %v2826 = vunpack.c.l.b16 %v1924
    %v2827 = vunpack.c.l.b16 %v1925
    %v2828 = vunpack.c.l.b16 %v1926
    %v2829 = vunpack.c.l.b16 %v1927
    %v2830 = vunpack.c.l.b16 %v1928
    %v2831 = vunpack.c.l.b16 %v1929
    %v2832 = vunpack.c.l.b16 %v1930
    %v2833 = vunpack.c.l.b16 %v1931
    %v2834 = vunpack.c.l.b16 %v1932
    %v2835 = vunpack.c.l.b16 %v1933
    %v2836 = vunpack.c.l.b16 %v1934
    %v2837 = vunpack.c.l.b16 %v1935
    %v2838 = vpack.c.b16 %v2823, %v2822
    %v2839 = vpack.c.b16 %v2825, %v2824
    %v2840 = vpack.c.b16 %v2827, %v2826
    %v2841 = vpack.c.b16 %v2829, %v2828
    %v2842 = vpack.c.b16 %v2831, %v2830
    %v2843 = vpack.c.b16 %v2833, %v2832
    %v2844 = vpack.c.b16 %v2835, %v2834
    %v2845 = vpack.c.b16 %v2837, %v2836
    %2854 = vmatpush.bf16.msra.mxu0 %v2845
    %2855 = vmatpush.bf16.msra.mxu0 %v2844
    %2856 = vmatpush.bf16.msra.mxu0 %v2843
    %2857 = vmatpush.bf16.msra.mxu0 %v2842
    %2858 = vmatpush.bf16.msra.mxu0 %v2841
    %2859 = vmatpush.bf16.msra.mxu0 %v2840
    %2860 = vmatpush.bf16.msra.mxu0 %v2839
    %2861 = vmatpush.bf16.msra.mxu0 %v2838
    %2862 = vmatmul.bf16.gmra.mxu0 %v2804
    %v2863 = vpop.f32.mrf.mxu0
    %v2864 = vadd.f32 0.0, %v2863
    %v2865 = vpop.f32.mrf.mxu0
    %v2866 = vadd.f32 0.0, %v2865
    %2867 = vdwg.mxu0
    %v2870 = vunpack.c.l.b16 %v1722
    %v2871 = vunpack.c.l.b16 %v1723
    %v2872 = vpack.c.b16 %v2871, %v2870
    %v2890 = vunpack.c.l.b16 %v1936
    %v2891 = vunpack.c.l.b16 %v1937
    %v2892 = vunpack.c.l.b16 %v1938
    %v2893 = vunpack.c.l.b16 %v1939
    %v2894 = vunpack.c.l.b16 %v1940
    %v2895 = vunpack.c.l.b16 %v1941
    %v2896 = vunpack.c.l.b16 %v1942
    %v2897 = vunpack.c.l.b16 %v1943
    %v2898 = vunpack.c.l.b16 %v1944
    %v2899 = vunpack.c.l.b16 %v1945
    %v2900 = vunpack.c.l.b16 %v1946
    %v2901 = vunpack.c.l.b16 %v1947
    %v2902 = vunpack.c.l.b16 %v1948
    %v2903 = vunpack.c.l.b16 %v1949
    %v2904 = vunpack.c.l.b16 %v1950
    %v2905 = vunpack.c.l.b16 %v1951
    %v2906 = vpack.c.b16 %v2891, %v2890
    %v2907 = vpack.c.b16 %v2893, %v2892
    %v2908 = vpack.c.b16 %v2895, %v2894
    %v2909 = vpack.c.b16 %v2897, %v2896
    %v2910 = vpack.c.b16 %v2899, %v2898
    %v2911 = vpack.c.b16 %v2901, %v2900
    %v2912 = vpack.c.b16 %v2903, %v2902
    %v2913 = vpack.c.b16 %v2905, %v2904
    %2922 = vmatpush.bf16.msra.mxu0 %v2913
    %2923 = vmatpush.bf16.msra.mxu0 %v2912
    %2924 = vmatpush.bf16.msra.mxu0 %v2911
    %2925 = vmatpush.bf16.msra.mxu0 %v2910
    %2926 = vmatpush.bf16.msra.mxu0 %v2909
    %2927 = vmatpush.bf16.msra.mxu0 %v2908
    %2928 = vmatpush.bf16.msra.mxu0 %v2907
    %2929 = vmatpush.bf16.msra.mxu0 %v2906
    %2930 = vmatmul.bf16.gmra.mxu0 %v2872
    %v2931 = vpop.f32.mrf.mxu0
    %v2932 = vadd.f32 0.0, %v2931
    %v2933 = vpop.f32.mrf.mxu0
    %v2934 = vadd.f32 0.0, %v2933
    %2935 = vdwg.mxu0
    %v2938 = vunpack.c.l.b16 %v1724
    %v2939 = vunpack.c.l.b16 %v1725
    %v2940 = vpack.c.b16 %v2939, %v2938
    %v2958 = vunpack.c.l.b16 %v1952
    %v2959 = vunpack.c.l.b16 %v1953
    %v2960 = vunpack.c.l.b16 %v1954
    %v2961 = vunpack.c.l.b16 %v1955
    %v2962 = vunpack.c.l.b16 %v1956
    %v2963 = vunpack.c.l.b16 %v1957
    %v2964 = vunpack.c.l.b16 %v1958
    %v2965 = vunpack.c.l.b16 %v1959
    %v2966 = vunpack.c.l.b16 %v1960
    %v2967 = vunpack.c.l.b16 %v1961
    %v2968 = vunpack.c.l.b16 %v1962
    %v2969 = vunpack.c.l.b16 %v1963
    %v2970 = vunpack.c.l.b16 %v1964
    %v2971 = vunpack.c.l.b16 %v1965
    %v2972 = vunpack.c.l.b16 %v1966
    %v2973 = vunpack.c.l.b16 %v1967
    %v2974 = vpack.c.b16 %v2959, %v2958
    %v2975 = vpack.c.b16 %v2961, %v2960
    %v2976 = vpack.c.b16 %v2963, %v2962
    %v2977 = vpack.c.b16 %v2965, %v2964
    %v2978 = vpack.c.b16 %v2967, %v2966
    %v2979 = vpack.c.b16 %v2969, %v2968
    %v2980 = vpack.c.b16 %v2971, %v2970
    %v2981 = vpack.c.b16 %v2973, %v2972
    %2990 = vmatpush.bf16.msra.mxu0 %v2981
    %2991 = vmatpush.bf16.msra.mxu0 %v2980
    %2992 = vmatpush.bf16.msra.mxu0 %v2979
    %2993 = vmatpush.bf16.msra.mxu0 %v2978
    %2994 = vmatpush.bf16.msra.mxu0 %v2977
    %2995 = vmatpush.bf16.msra.mxu0 %v2976
    %2996 = vmatpush.bf16.msra.mxu0 %v2975
    %2997 = vmatpush.bf16.msra.mxu0 %v2974
    %2998 = vmatmul.bf16.gmra.mxu0 %v2940
    %v2999 = vpop.f32.mrf.mxu0
    %v3000 = vadd.f32 0.0, %v2999
    %v3001 = vpop.f32.mrf.mxu0
    %v3002 = vadd.f32 0.0, %v3001
    %3003 = vdwg.mxu0
    %v3006 = vunpack.c.l.b16 %v1726
    %v3007 = vunpack.c.l.b16 %v1727
    %v3008 = vpack.c.b16 %v3007, %v3006
    %v3026 = vunpack.c.l.b16 %v1968
    %v3027 = vunpack.c.l.b16 %v1969
    %v3028 = vunpack.c.l.b16 %v1970
    %v3029 = vunpack.c.l.b16 %v1971
    %v3030 = vunpack.c.l.b16 %v1972
    %v3031 = vunpack.c.l.b16 %v1973
    %v3032 = vunpack.c.l.b16 %v1974
    %v3033 = vunpack.c.l.b16 %v1975
    %v3034 = vunpack.c.l.b16 %v1976
    %v3035 = vunpack.c.l.b16 %v1977
    %v3036 = vunpack.c.l.b16 %v1978
    %v3037 = vunpack.c.l.b16 %v1979
    %v3038 = vunpack.c.l.b16 %v1980
    %v3039 = vunpack.c.l.b16 %v1981
    %v3040 = vunpack.c.l.b16 %v1982
    %v3041 = vunpack.c.l.b16 %v1983
    %v3042 = vpack.c.b16 %v3027, %v3026
    %v3043 = vpack.c.b16 %v3029, %v3028
    %v3044 = vpack.c.b16 %v3031, %v3030
    %v3045 = vpack.c.b16 %v3033, %v3032
    %v3046 = vpack.c.b16 %v3035, %v3034
    %v3047 = vpack.c.b16 %v3037, %v3036
    %v3048 = vpack.c.b16 %v3039, %v3038
    %v3049 = vpack.c.b16 %v3041, %v3040
    %3058 = vmatpush.bf16.msra.mxu0 %v3049
    %3059 = vmatpush.bf16.msra.mxu0 %v3048
    %3060 = vmatpush.bf16.msra.mxu0 %v3047
    %3061 = vmatpush.bf16.msra.mxu0 %v3046
    %3062 = vmatpush.bf16.msra.mxu0 %v3045
    %3063 = vmatpush.bf16.msra.mxu0 %v3044
    %3064 = vmatpush.bf16.msra.mxu0 %v3043
    %3065 = vmatpush.bf16.msra.mxu0 %v3042
    %3066 = vmatmul.bf16.gmra.mxu0 %v3008
    %v3067 = vpop.f32.mrf.mxu0
    %v3068 = vadd.f32 0.0, %v3067
    %v3069 = vpop.f32.mrf.mxu0
    %v3070 = vadd.f32 0.0, %v3069
    %3071 = vdwg.mxu0
    %v3072 = vadd.f32 %v2048, %v2116
    %v3073 = vadd.f32 %v3072, %v2184
    %v3074 = vadd.f32 %v3073, %v2252
    %v3075 = vadd.f32 %v3074, %v2320
    %v3076 = vadd.f32 %v3075, %v2388
    %v3077 = vadd.f32 %v3076, %v2456
    %v3078 = vadd.f32 %v3077, %v2524
    %v3079 = vadd.f32 %v3078, %v2592
    %v3080 = vadd.f32 %v3079, %v2660
    %v3081 = vadd.f32 %v3080, %v2728
    %v3082 = vadd.f32 %v3081, %v2796
    %v3083 = vadd.f32 %v3082, %v2864
    %v3084 = vadd.f32 %v3083, %v2932
    %v3085 = vadd.f32 %v3084, %v3000
    %v3086 = vadd.f32 %v3085, %v3068
    %v3087 = vadd.f32 %v2050, %v2118
    %v3088 = vadd.f32 %v3087, %v2186
    %v3089 = vadd.f32 %v3088, %v2254
    %v3090 = vadd.f32 %v3089, %v2322
    %v3091 = vadd.f32 %v3090, %v2390
    %v3092 = vadd.f32 %v3091, %v2458
    %v3093 = vadd.f32 %v3092, %v2526
    %v3094 = vadd.f32 %v3093, %v2594
    %v3095 = vadd.f32 %v3094, %v2662
    %v3096 = vadd.f32 %v3095, %v2730
    %v3097 = vadd.f32 %v3096, %v2798
    %v3098 = vadd.f32 %v3097, %v2866
    %v3099 = vadd.f32 %v3098, %v2934
    %v3100 = vadd.f32 %v3099, %v3002
    %v3101 = vadd.f32 %v3100, %v3070
    %v3102 = vld [vmem:[%s10] sm:$0x1]
    %v3104 = vperm.slane %v3102, 0
    %v3106 = vadd.f32 %v3086, %v3104
    %v3107 = vadd.f32 %v3101, %v3104
    %v3108 = vlaneseq
    %v3109 = vshrl.u32 %v3108, 7
    %v3110 = vadd.s32 %v3109, 8
    %v3111 = vlaneseq
    %v3112 = vand.u32 %v3111, 127
    %vm3113 = vcmp.lt.s32.totalorder %v3112, 10
    %v3114 = vsel %vm3113, %v3106, -1e+30
    %v3115 = vsel %vm3113, %v3107, -1e+30
    %3116 = vmax.xlane.f32.xlu0 %v3114
    %v3117 = vpop.xlane.xlu0 %3116
    %3118 = vmax.xlane.f32.xlu0 %v3115
    %v3119 = vpop.xlane.xlu0 %3118
    %v3120 = vsub.f32 %v3114, %v3117
    %v3121 = vsub.f32 %v3115, %v3119
    %v3122 = vmul.f32 %v3120, 1.442695
    %v3123 = vpow.pop %v3122
    %v3124 = vmul.f32 %v3121, 1.442695
    %v3125 = vpow.pop %v3124
    %3126 = vadd.xlane.f32.xlu0 %v3123
    %v3127 = vpop.xlane.xlu0 %3126
    %3128 = vadd.xlane.f32.xlu0 %v3125
    %v3129 = vpop.xlane.xlu0 %3128
    %v3130 = vlog2.pop %v3127
    %v3131 = vmul.f32 %v3130, 0.6931472
    %v3132 = vlog2.pop %v3129
    %v3133 = vmul.f32 %v3132, 0.6931472
    %vm3134 = vcmp.eq.s32.totalorder %v3109, 0
    %vm3135 = vcmp.eq.s32.totalorder %v3110, 0
    %s3136 = sld [smem:[#allocation2]]
    %v3137 = vstv %s3136
    %vm3138 = vcmp.eq.s32.totalorder %v3112, %v3137
    %vm3139 = vmand %vm3134, %vm3138
    %vm3140 = vmand %vm3135, %vm3138
    %v3141 = vsel %vm3139, 1, 0
    %v3142 = vsel %vm3140, 1, 0
    %v3143 = vcvt.s32.f32 %v3141
    %v3144 = vcvt.s32.f32 %v3142
    %v3145 = vadd.f32 %v3143, 0.0
    %v3146 = vadd.f32 %v3144, 0.0
    %vm3147 = vcmp.eq.s32.totalorder %v3109, 1
    %vm3148 = vcmp.eq.s32.totalorder %v3110, 1
    %s3149 = sld [smem:[#allocation2 + $0x1]]
    %v3150 = vstv %s3149
    %vm3151 = vcmp.eq.s32.totalorder %v3112, %v3150
    %vm3152 = vmand %vm3147, %vm3151
    %vm3153 = vmand %vm3148, %vm3151
    %v3154 = vsel %vm3152, 1, 0
    %v3155 = vsel %vm3153, 1, 0
    %v3156 = vcvt.s32.f32 %v3154
    %v3157 = vcvt.s32.f32 %v3155
    %v3158 = vadd.f32 %v3145, %v3156
    %v3159 = vadd.f32 %v3146, %v3157
    %v3160 = vmul.f32 %v3158, %v3114
    %v3161 = vmul.f32 %v3159, %v3115
    %3162 = vadd.xlane.f32.xlu0 %v3160
    %v3163 = vpop.xlane.xlu0 %3162
    %3164 = vadd.xlane.f32.xlu0 %v3161
    %v3165 = vpop.xlane.xlu0 %3164
    %v3166 = vadd.f32 %v3117, %v3131
    %v3167 = vadd.f32 %v3119, %v3133
    %v3168 = vsub.f32 %v3166, %v3163
    %v3169 = vsub.f32 %v3167, %v3165
    %vm3170 = vcmp.lt.s32.totalorder %v3109, 2
    %vm3171 = vcmp.lt.s32.totalorder %v3110, 2
    %v3172 = vsel %vm3170, %v3168, 0.0
    %v3173 = vsel %vm3171, %v3169, 0.0
    %vm3174 = vcmask 7168
    %v3175 = vsel %vm3174, %v3172, 0.0
    %v3176 = vsel %vm3174, %v3173, 0.0
    %v3177 = vadd.f32 %v3175, %v3176
    %3178 = vadd.xlane.f32.xlu0 %v3177
    %v3179 = vpop.xlane.xlu0 %3178
    %v3180 = vrot.slane %v3179, 4
    %v3181 = vadd.f32 %v3179, %v3180
    %v3182 = vrot.slane %v3181, 2
    %v3183 = vadd.f32 %v3181, %v3182
    %v3184 = vrot.slane %v3183, 1
    %v3185 = vadd.f32 %v3183, %v3184
    %s3186 = vtos %v3185
    %s3187 = smul.f32 %s3186, 0.5
    %v3188 = vstv %s3187
    %v3189 = vsel %vm3170, %v3106, %v3188
    %v3190 = vsel %vm3171, %v3107, %v3188
    %3191 = vst [vmem:[%s12] sm:$0xff] %v3189
    %3192 = vst [vmem:[%s12 + $0x8] sm:$0xff] %v3190
    // Predicated region
    $region54: #{create_model_forward.1} parent=1 // pred_check
      _
    $region55: #{create_model_forward.1} parent=1 // pred_check_branch
      %3194 = sbr.rel (0) target = $region57
    $region56: #{create_model_forward.1} parent=1 // pred_region
      _
    $region57: #{create_model_forward.1} parent=1 // pred_fallthru
      _
    // Predicated region
    $region58: #{create_model_forward.1} parent=1 // pred_check
      _
    $region59: #{create_model_forward.1} parent=1 // pred_check_branch
      %3196 = sbr.rel (0) target = $region61
    $region60: #{create_model_forward.1} parent=1 // pred_region
      _
    $region61: #{create_model_forward.1} parent=1 // pred_fallthru
      _
    %3197 = vsyncpa [#allocation3], 1

</llo_original>
